<compile_context>
chip_gen: v6e
topology: v6e:2x2x1
jax: 0.10.0
libtpu: 0.0.40
codegen_flags: <defaults>
</compile_context>

<pallas_src>
import functools

import jax
import jax.numpy as jnp
from jax.experimental import pallas as pl
from jax.experimental.pallas import tpu as pltpu


def transformer_layer_kernel(x_ref, wqkv_ref, bqkv_ref, wo_ref, bo_ref,
                             wffn_ref, o_ref, *, num_heads):
    """One batch element per grid step.

    x_ref    : (1, L, C)  f32   activations
    wqkv_ref : (C, 3C)    bf16  composed (outer q/k/v Linear) o (MHA in-proj);
                                1/sqrt(D) scale folded into the Q third
    bqkv_ref : (1, 3C)    f32   composed in-proj bias (Q third pre-scaled)
    wo_ref   : (C, C)     bf16  MHA out-projection weight (transposed)
    bo_ref   : (1, C)     f32   MHA out-projection bias
    wffn_ref : (C, C)     bf16  fc2 o fc1 composed weight (both bias-free)
    o_ref    : (1, L, C)  f32
    """
    x = x_ref[0]                                   # (L, C) f32
    L, C = x.shape
    H = num_heads
    D = C // H

    xb = x.astype(jnp.bfloat16)

    # Fused q/k/v projection: one (L, C) x (C, 3C) GEMM, f32 accumulation.
    qkv = jnp.dot(xb, wqkv_ref[...],
                  preferred_element_type=jnp.float32) + bqkv_ref[...]   # (L, 3C) f32

    q = qkv[:, :C]              # already scaled by 1/sqrt(D) via the folded weight
    k = qkv[:, C:2 * C]
    v = qkv[:, 2 * C:]

    # Head-major (H, L, D) layout for batched attention matmuls.
    def to_heads(t):
        return jnp.transpose(t.reshape(L, H, D), (1, 0, 2)).astype(jnp.bfloat16)

    qh, kh, vh = to_heads(q), to_heads(k), to_heads(v)

    # Scores for all heads in one batched contraction (no materialized k^T).
    s = jnp.einsum("hld,hmd->hlm", qh, kh,
                   preferred_element_type=jnp.float32)                  # (H, L, L) f32

    # Softmax in f32; normalize via EUP approximate reciprocal (no VALU divide).
    s = s - jnp.max(s, axis=-1, keepdims=True)
    p = jnp.exp(s)
    p = p * pl.reciprocal(jnp.sum(p, axis=-1, keepdims=True), approx=True)

    o = jnp.einsum("hlm,hmd->hld", p.astype(jnp.bfloat16), vh,
                   preferred_element_type=jnp.float32)                  # (H, L, D) f32
    attn = jnp.transpose(o, (1, 0, 2)).reshape(L, C)                    # (L, C) f32

    # Out-projection (bias) + residual; residual stays in f32.
    attn = jnp.dot(attn.astype(jnp.bfloat16), wo_ref[...],
                   preferred_element_type=jnp.float32) + bo_ref[...]
    y1 = attn + x

    # fc2(fc1(y1)) + y1, with fc2 o fc1 composed into one GEMM.
    y2 = jnp.dot(y1.astype(jnp.bfloat16), wffn_ref[...],
                 preferred_element_type=jnp.float32) + y1
    o_ref[0] = y2


def _prepare_weights(params, num_heads):
    """Compose / fuse the five Linear weights into three bf16 GEMM operands."""
    C = params["wq"].shape[0]
    D = C // num_heads
    scale = 1.0 / float(D) ** 0.5

    wiq, wik, wiv = jnp.split(params["in_w"], 3, axis=0)
    biq, bik, biv = jnp.split(params["in_b"], 3)

    # (x @ Wq^T) @ Wiq^T == x @ (Wq^T Wiq^T): compose in f32, then cast.
    wq_c = params["wq"].T @ wiq.T
    wk_c = params["wk"].T @ wik.T
    wv_c = params["wv"].T @ wiv.T
    w_qkv = jnp.concatenate([wq_c * scale, wk_c, wv_c], axis=1)          # (C, 3C)
    b_qkv = jnp.concatenate([biq * scale, bik, biv]).reshape(1, 3 * C)   # (1, 3C)

    w_out = params["out_w"].T                                            # (C, C)
    b_out = params["out_b"].reshape(1, C)
    w_ffn = params["w1"].T @ params["w2"].T                              # (C, C) fc2 o fc1

    return (w_qkv.astype(jnp.bfloat16), b_qkv.astype(jnp.float32),
            w_out.astype(jnp.bfloat16), b_out.astype(jnp.float32),
            w_ffn.astype(jnp.bfloat16))


def transformer_layer(x_lnc, params, num_heads):
    """x_lnc: (L, N, C) float32.  Returns (L, N, C) float32."""
    L, N, C = x_lnc.shape
    assert C % num_heads == 0
    w_qkv, b_qkv, w_out, b_out, w_ffn = _prepare_weights(params, num_heads)

    # Batch-major so each grid step gets a dense (L, C) tile.  A direct
    # (L, 1, C)-block over the (L, N, C) layout would place a size-1 block on
    # the second-minor dim (N=2), violating the (8,128)-or-full rule, so the
    # transpose is kept (cheap relative to the fused GEMMs).
    x = jnp.transpose(x_lnc, (1, 0, 2))            # (N, L, C)

    C3 = 3 * C
    grid_invariant = lambda n: (0, 0)              # weights: resident, no re-DMA
    in_specs = [
        pl.BlockSpec((1, L, C), lambda n: (n, 0, 0)),   # x
        pl.BlockSpec((C, C3), grid_invariant),          # w_qkv (bf16)
        pl.BlockSpec((1, C3), grid_invariant),          # b_qkv (f32)
        pl.BlockSpec((C, C), grid_invariant),           # w_out (bf16)
        pl.BlockSpec((1, C), grid_invariant),           # b_out (f32)
        pl.BlockSpec((C, C), grid_invariant),           # w_ffn (bf16)
    ]

    out = pl.pallas_call(
        functools.partial(transformer_layer_kernel, num_heads=num_heads),
        out_shape=jax.ShapeDtypeStruct((N, L, C), jnp.float32),
        grid_spec=pltpu.PrefetchScalarGridSpec(
            num_scalar_prefetch=0,
            grid=(N,),
            in_specs=in_specs,
            out_specs=pl.BlockSpec((1, L, C), lambda n: (n, 0, 0)),
        ),
        compiler_params=pltpu.CompilerParams(
            dimension_semantics=("parallel",),          # keep both v7x TCs busy
            vmem_limit_bytes=32 * 1024 * 1024,          # safe on v5e/v6e/v7x
        ),
    )(x, w_qkv, b_qkv, w_out, b_out, w_ffn)

    return jnp.transpose(out, (1, 0, 2))           # back to (L, N, C)


def reference(x, p, num_heads):
    """Pure-JAX f32 reference mirroring the PyTorch forward semantics."""
    L, N, C = x.shape
    D = C // num_heads
    q = x @ p["wq"].T
    k = x @ p["wk"].T
    v = x @ p["wv"].T
    wiq, wik, wiv = jnp.split(p["in_w"], 3, axis=0)
    biq, bik, biv = jnp.split(p["in_b"], 3)
    q2 = q @ wiq.T + biq
    k2 = k @ wik.T + bik
    v2 = v @ wiv.T + biv

    def heads(t):
        return jnp.transpose(t.reshape(L, N, num_heads, D), (1, 2, 0, 3))

    qh = heads(q2) * (1.0 / float(D) ** 0.5)
    kh = heads(k2)
    vh = heads(v2)
    s = qh @ jnp.swapaxes(kh, -1, -2)
    a = jax.nn.softmax(s, axis=-1)
    o = a @ vh                                     # (N, H, L, D)
    o = jnp.transpose(o, (2, 0, 1, 3)).reshape(L, N, C)
    o = o @ p["out_w"].T + p["out_b"]
    y1 = o + x
    return (y1 @ p["w1"].T) @ p["w2"].T + y1


def init_params(key, c):
    ks = jax.random.split(key, 9)
    s = 0.1
    return {
        "wq": jax.random.normal(ks[0], (c, c), jnp.float32) * s,
        "wk": jax.random.normal(ks[1], (c, c), jnp.float32) * s,
        "wv": jax.random.normal(ks[2], (c, c), jnp.float32) * s,
        "in_w": jax.random.normal(ks[3], (3 * c, c), jnp.float32) * s,
        "in_b": jax.random.normal(ks[4], (3 * c,), jnp.float32) * s,
        "out_w": jax.random.normal(ks[5], (c, c), jnp.float32) * s,
        "out_b": jax.random.normal(ks[6], (c,), jnp.float32) * s,
        "w1": jax.random.normal(ks[7], (c, c), jnp.float32) * s,
        "w2": jax.random.normal(ks[8], (c, c), jnp.float32) * s,
    }


if __name__ == "__main__":
    L, N, C, H = 8, 2, 32, 4          # seq, batch, channels, heads
    key = jax.random.PRNGKey(0)
    kx, kp = jax.random.split(key)
    x = jax.random.normal(kx, (L, N, C), jnp.float32)
    params = init_params(kp, C)

    out = transformer_layer(x, params, H)
    out = jax.block_until_ready(out)

    ref = reference(x, params, H)
    assert out.shape == (L, N, C)
    # bf16 MXU inputs with f32 accumulation -> relaxed tolerance vs the pure-f32
    # reference (typical max-abs error observed is ~1e-2 at these scales).
    err = float(jnp.max(jnp.abs(out - ref)))
    assert jnp.allclose(out, ref, atol=5e-2, rtol=5e-2), (
        f"mismatch vs reference (max abs err {err})")
    print("KERNEL_OK")
</pallas_src>

<mosaic_0001>
module attributes {stable_mosaic.version = 11 : i64} {
  func.func @transformer_layer_kernel(%arg0: i32, %arg1: memref<1x8x32xf32, #tpu.memory_space<vmem>>, %arg2: memref<32x96xbf16, #tpu.memory_space<vmem>>, %arg3: memref<1x96xf32, #tpu.memory_space<vmem>>, %arg4: memref<32x32xbf16, #tpu.memory_space<vmem>>, %arg5: memref<1x32xf32, #tpu.memory_space<vmem>>, %arg6: memref<32x32xbf16, #tpu.memory_space<vmem>>, %arg7: memref<1x8x32xf32, #tpu.memory_space<vmem>>) attributes {dimension_semantics = [#tpu.dimension_semantics<parallel>], iteration_bounds = array<i64: 2>, scalar_prefetch = 0 : i64, scratch_operands = 0 : i64, tpu.core_type = #tpu.core_type<tc>, window_params = [{transform_indices = @transform_0, window_bounds = array<i64: 1, 8, 32>}, {pipeline_mode = #tpu.pipeline_mode<synchronous>, transform_indices = @transform_1, window_bounds = array<i64: 32, 96>}, {pipeline_mode = #tpu.pipeline_mode<synchronous>, transform_indices = @transform_2, window_bounds = array<i64: 1, 96>}, {pipeline_mode = #tpu.pipeline_mode<synchronous>, transform_indices = @transform_3, window_bounds = array<i64: 32, 32>}, {pipeline_mode = #tpu.pipeline_mode<synchronous>, transform_indices = @transform_4, window_bounds = array<i64: 1, 32>}, {pipeline_mode = #tpu.pipeline_mode<synchronous>, transform_indices = @transform_5, window_bounds = array<i64: 32, 32>}, {transform_indices = @transform_6, window_bounds = array<i64: 1, 8, 32>}]} {
    %c0 = arith.constant 0 : index
    %c0_0 = arith.constant 0 : index
    %c0_1 = arith.constant 0 : index
    %0 = vector.load %arg1[%c0, %c0_0, %c0_1] : memref<1x8x32xf32, #tpu.memory_space<vmem>>, vector<1x8x32xf32>
    %1 = vector.shape_cast %0 : vector<1x8x32xf32> to vector<8x32xf32>
    %2 = arith.truncf %1 : vector<8x32xf32> to vector<8x32xbf16>
    %c0_2 = arith.constant 0 : index
    %c0_3 = arith.constant 0 : index
    %3 = vector.load %arg2[%c0_2, %c0_3] : memref<32x96xbf16, #tpu.memory_space<vmem>>, vector<32x96xbf16>
    %cst = arith.constant dense<0.000000e+00> : vector<8x96xf32>
    %4 = tpu.matmul %2, %3, %cst {dimension_numbers = #tpu.dot_dimension_numbers<[1], [0], [0], [1], [0, 0, 1, 1], [], []>} : vector<8x32xbf16>, vector<32x96xbf16>, vector<8x96xf32> -> vector<8x96xf32>
    %c0_4 = arith.constant 0 : index
    %c0_5 = arith.constant 0 : index
    %5 = vector.load %arg3[%c0_4, %c0_5] : memref<1x96xf32, #tpu.memory_space<vmem>>, vector<1x96xf32>
    %6 = vector.broadcast %5 : vector<1x96xf32> to vector<8x96xf32>
    %7 = arith.addf %4, %6 : vector<8x96xf32>
    %8 = vector.extract_strided_slice %7 {offsets = [0, 0], sizes = [8, 32], strides = [1, 1]} : vector<8x96xf32> to vector<8x32xf32>
    %9 = vector.extract_strided_slice %7 {offsets = [0, 32], sizes = [8, 32], strides = [1, 1]} : vector<8x96xf32> to vector<8x32xf32>
    %10 = vector.extract_strided_slice %7 {offsets = [0, 64], sizes = [8, 32], strides = [1, 1]} : vector<8x96xf32> to vector<8x32xf32>
    %11 = vector.shape_cast %8 : vector<8x32xf32> to vector<8x4x8xf32>
    %12 = tpu.transpose %11, [1, 0, 2] : vector<8x4x8xf32> -> vector<4x8x8xf32>
    %13 = arith.truncf %12 : vector<4x8x8xf32> to vector<4x8x8xbf16>
    %14 = vector.shape_cast %9 : vector<8x32xf32> to vector<8x4x8xf32>
    %15 = tpu.transpose %14, [1, 0, 2] : vector<8x4x8xf32> -> vector<4x8x8xf32>
    %16 = arith.truncf %15 : vector<4x8x8xf32> to vector<4x8x8xbf16>
    %17 = vector.shape_cast %10 : vector<8x32xf32> to vector<8x4x8xf32>
    %18 = tpu.transpose %17, [1, 0, 2] : vector<8x4x8xf32> -> vector<4x8x8xf32>
    %19 = arith.truncf %18 : vector<4x8x8xf32> to vector<4x8x8xbf16>
    "tpu.trace_start"() <{level = 10 : i32, message = "hld,hmd->hlm"}> : () -> ()
    %cst_6 = arith.constant dense<0.000000e+00> : vector<4x8x8xf32>
    %20 = tpu.matmul %13, %16, %cst_6 {dimension_numbers = #tpu.dot_dimension_numbers<[2], [2], [1], [1], [0, 0, 0, 1, 1, 1], [0], [0]>} : vector<4x8x8xbf16>, vector<4x8x8xbf16>, vector<4x8x8xf32> -> vector<4x8x8xf32>
    "tpu.trace_stop"() : () -> ()
    %cst_7 = arith.constant dense<0xFF800000> : vector<4x8xf32>
    %21 = vector.multi_reduction <maximumf>, %20, %cst_7 [2] : vector<4x8x8xf32> to vector<4x8xf32>
    %22 = vector.shape_cast %21 : vector<4x8xf32> to vector<4x8x1xf32>
    %23 = vector.broadcast %22 : vector<4x8x1xf32> to vector<4x8x8xf32>
    %24 = arith.subf %20, %23 : vector<4x8x8xf32>
    %25 = math.exp %24 : vector<4x8x8xf32>
    %cst_8 = arith.constant dense<0.000000e+00> : vector<4x8xf32>
    %26 = vector.multi_reduction <add>, %25, %cst_8 [2] : vector<4x8x8xf32> to vector<4x8xf32>
    %27 = vector.shape_cast %26 : vector<4x8xf32> to vector<4x8x1xf32>
    %28 = tpu.reciprocal %27 {approx = true} : vector<4x8x1xf32> -> vector<4x8x1xf32>
    %29 = vector.broadcast %28 : vector<4x8x1xf32> to vector<4x8x8xf32>
    %30 = arith.mulf %25, %29 : vector<4x8x8xf32>
    %31 = arith.truncf %30 : vector<4x8x8xf32> to vector<4x8x8xbf16>
    "tpu.trace_start"() <{level = 10 : i32, message = "hlm,hmd->hld"}> : () -> ()
    %cst_9 = arith.constant dense<0.000000e+00> : vector<4x8x8xf32>
    %32 = tpu.matmul %31, %19, %cst_9 {dimension_numbers = #tpu.dot_dimension_numbers<[2], [1], [1], [2], [0, 0, 0, 1, 1, 2], [0], [0]>} : vector<4x8x8xbf16>, vector<4x8x8xbf16>, vector<4x8x8xf32> -> vector<4x8x8xf32>
    "tpu.trace_stop"() : () -> ()
    %33 = tpu.transpose %32, [1, 0, 2] : vector<4x8x8xf32> -> vector<8x4x8xf32>
    %34 = vector.shape_cast %33 : vector<8x4x8xf32> to vector<8x32xf32>
    %35 = arith.truncf %34 : vector<8x32xf32> to vector<8x32xbf16>
    %c0_10 = arith.constant 0 : index
    %c0_11 = arith.constant 0 : index
    %36 = vector.load %arg4[%c0_10, %c0_11] : memref<32x32xbf16, #tpu.memory_space<vmem>>, vector<32x32xbf16>
    %cst_12 = arith.constant dense<0.000000e+00> : vector<8x32xf32>
    %37 = tpu.matmul %35, %36, %cst_12 {dimension_numbers = #tpu.dot_dimension_numbers<[1], [0], [0], [1], [0, 0, 1, 1], [], []>} : vector<8x32xbf16>, vector<32x32xbf16>, vector<8x32xf32> -> vector<8x32xf32>
    %c0_13 = arith.constant 0 : index
    %c0_14 = arith.constant 0 : index
    %38 = vector.load %arg5[%c0_13, %c0_14] : memref<1x32xf32, #tpu.memory_space<vmem>>, vector<1x32xf32>
    %39 = vector.broadcast %38 : vector<1x32xf32> to vector<8x32xf32>
    %40 = arith.addf %37, %39 : vector<8x32xf32>
    %41 = arith.addf %40, %1 : vector<8x32xf32>
    %42 = arith.truncf %41 : vector<8x32xf32> to vector<8x32xbf16>
    %c0_15 = arith.constant 0 : index
    %c0_16 = arith.constant 0 : index
    %43 = vector.load %arg6[%c0_15, %c0_16] : memref<32x32xbf16, #tpu.memory_space<vmem>>, vector<32x32xbf16>
    %cst_17 = arith.constant dense<0.000000e+00> : vector<8x32xf32>
    %44 = tpu.matmul %42, %43, %cst_17 {dimension_numbers = #tpu.dot_dimension_numbers<[1], [0], [0], [1], [0, 0, 1, 1], [], []>} : vector<8x32xbf16>, vector<32x32xbf16>, vector<8x32xf32> -> vector<8x32xf32>
    %45 = arith.addf %44, %41 : vector<8x32xf32>
    %c0_18 = arith.constant 0 : index
    %c0_19 = arith.constant 0 : index
    %c0_20 = arith.constant 0 : index
    %46 = vector.load %arg7[%c0_18, %c0_19, %c0_20] : memref<1x8x32xf32, #tpu.memory_space<vmem>>, vector<1x8x32xf32>
    %47 = vector.shape_cast %46 : vector<1x8x32xf32> to vector<8x32xf32>
    %48 = vector.shape_cast %45 : vector<8x32xf32> to vector<1x8x32xf32>
    tpu.vector_store %arg7[%c0_18, %c0_19, %c0_20], %48 {strides = array<i32>} : memref<1x8x32xf32, #tpu.memory_space<vmem>>, vector<1x8x32xf32>,
    return
  }
  func.func @transform_0(%arg0: i32) -> (i32, i32, i32) {
    %c0_i32 = arith.constant 0 : i32
    %c0_i32_0 = arith.constant 0 : i32
    %c0_i32_1 = arith.constant 0 : i32
    return %arg0, %c0_i32, %c0_i32_0 : i32, i32, i32
  }
  func.func @transform_1(%arg0: i32) -> (i32, i32) {
    %c0_i32 = arith.constant 0 : i32
    %c0_i32_0 = arith.constant 0 : i32
    %c0_i32_1 = arith.constant 0 : i32
    return %c0_i32, %c0_i32_0 : i32, i32
  }
  func.func @transform_2(%arg0: i32) -> (i32, i32) {
    %c0_i32 = arith.constant 0 : i32
    %c0_i32_0 = arith.constant 0 : i32
    %c0_i32_1 = arith.constant 0 : i32
    return %c0_i32, %c0_i32_0 : i32, i32
  }
  func.func @transform_3(%arg0: i32) -> (i32, i32) {
    %c0_i32 = arith.constant 0 : i32
    %c0_i32_0 = arith.constant 0 : i32
    %c0_i32_1 = arith.constant 0 : i32
    return %c0_i32, %c0_i32_0 : i32, i32
  }
  func.func @transform_4(%arg0: i32) -> (i32, i32) {
    %c0_i32 = arith.constant 0 : i32
    %c0_i32_0 = arith.constant 0 : i32
    %c0_i32_1 = arith.constant 0 : i32
    return %c0_i32, %c0_i32_0 : i32, i32
  }
  func.func @transform_5(%arg0: i32) -> (i32, i32) {
    %c0_i32 = arith.constant 0 : i32
    %c0_i32_0 = arith.constant 0 : i32
    %c0_i32_1 = arith.constant 0 : i32
    return %c0_i32, %c0_i32_0 : i32, i32
  }
  func.func @transform_6(%arg0: i32) -> (i32, i32, i32) {
    %c0_i32 = arith.constant 0 : i32
    %c0_i32_0 = arith.constant 0 : i32
    %c0_i32_1 = arith.constant 0 : i32
    return %arg0, %c0_i32, %c0_i32_0 : i32, i32, i32
  }
}

</mosaic_0001>

<llo_original>
// kernel: tpu_custom_call.1
$region0: #{tpu_custom_call.1}
  #allocation0 [shape = 'u32[]', space=smem, size = 0x4, offset = 0x4, fixed_abs, tag = 'smem constant byte address 0x4 - core index']
  #allocation1 [shape = 'u32[144,128]{1,0:T(1,128)}', space=vmem, size = 0x12000, scoped, tag = 'internal scratch']
  %s0 = inlined_call_operand.hbm [shape: f32[2,8,32], index: 0, kind: input, shape index: {}]
  %s1 = inlined_call_operand.hbm [shape: bf16[32,96], index: 1, kind: input, shape index: {}]
  %s2 = inlined_call_operand.vmem [shape: f32[1,96], index: 2, kind: input, shape index: {}]
  %s3 = inlined_call_operand.hbm [shape: bf16[32,32], index: 3, kind: input, shape index: {}]
  %s4 = inlined_call_operand.vmem [shape: f32[1,32], index: 4, kind: input, shape index: {}]
  %s5 = inlined_call_operand.hbm [shape: bf16[32,32], index: 5, kind: input, shape index: {}]
  %s6 = inlined_call_operand.hbm [shape: f32[2,8,32], index: 6, kind: output, shape index: {}]
  %s7 = sld [smem:[#allocation0]]
  $region73: #{tpu_custom_call.1} parent=0
    _
  %s9 = ssub.s32 1, %s7
  %s10 = scalar_select 0, %s9, %s7
  $region1: #{tpu_custom_call.1} parent=0
    #allocation2 [shape = 'u8[8192]{0}', space=vmem, size = 0x2000, scoped, tag = 'input window, operand 0']
    #allocation3 [shape = 's32[2]{0}', space=sflag, size = 0x8, scoped, tag = 'scoped memory for tpu_custom_call.1']
    #allocation4 [shape = 's32[2]{0}', space=sflag, size = 0x8, scoped, tag = 'scoped memory for tpu_custom_call.1']
    #allocation5 [shape = 'u8[8192]{0}', space=vmem, size = 0x2000, scoped, tag = 'input window, operand 1, single buffered']
    #allocation6 [shape = 's32[1]{0}', space=sflag, size = 0x4, scoped, tag = 'scoped memory for tpu_custom_call.1']
    #allocation7 [shape = 'u8[8192]{0}', space=vmem, size = 0x2000, scoped, tag = 'input window, operand 3, single buffered']
    #allocation8 [shape = 'u8[8192]{0}', space=vmem, size = 0x2000, scoped, tag = 'input window, operand 5, single buffered']
    #allocation9 [shape = 's32[1]{0}', space=sflag, size = 0x4, scoped, tag = 'scoped memory for tpu_custom_call.1']
    #allocation10 [shape = 'u8[8192]{0}', space=vmem, size = 0x2000, scoped, tag = 'output window, operand 0']
    %11 = vsyncpa [#allocation3], 0
    %s12 = scalar_lea.sflag [#allocation3], 1
    %13 = vsyncpa %s12, 0
    %14 = vsyncpa [#allocation6], 0
    %15 = vsyncpa [#allocation9], 0
    %16 = vsyncpa [#allocation4], 0
    %s17 = scalar_lea.sflag [#allocation4], 1
    %18 = vsyncpa %s17, 0
    loop: start=0, step=1, limit=4
    $region2: #{tpu_custom_call.1} parent=1 // loop_pre_header
      _
    $region3: #{tpu_custom_call.1} parent=1 // loop_header
      %s20 = sphi 0, %s24
      %p21 = scmp.ge.s32.totalorder %s20, 4
      %s30 = sphi 0, %s32
      %s33 = sphi 0, %s30
      %s34 = sphi 0, %s33
      %s50 = sphi 0, %s34
      %s54 = sphi 0, %s54
      %s56 = sphi 0, %s54
      %s57 = sphi 0, %s56
      %s71 = sphi 0, %s57
      %s75 = sphi 0, %s75
      %s77 = sphi 0, %s75
      %s78 = sphi 0, %s77
      %s92 = sphi 0, %s78
      %s96 = sphi 0, %s96
      %s98 = sphi 0, %s96
      %s99 = sphi 0, %s98
      %s113 = sphi 0, %s99
      %s117 = sphi 0, %s117
      %s119 = sphi 0, %s117
      %s120 = sphi 0, %s119
      %s134 = sphi 0, %s120
      %s138 = sphi 0, %s138
      %s140 = sphi 0, %s138
      %s141 = sphi 0, %s140
      %s155 = sphi 0, %s141
      %s161 = sphi 0, %s163
      %s164 = sphi 0, %s161
      %s165 = sphi 0, %s164
      %s181 = sphi 0, %s165
    $region4: #{tpu_custom_call.1} parent=1 // loop_header_branch
      %23 = sbr.rel (%p21) target = $region8
    $region5: #{tpu_custom_call.1} parent=1 // loop_body
      %s25 = ssub.s32 %s20, 1
      %s26 = ssub.s32 %s20, 2
      %s27 = sadd.s32 %s20, 1
      %s28 = ssub.s32 %s20, %s27
      %p29 = scmp.eq.s32.totalorder %s28, 0
      %s31 = sadd.s32 %s30, 1
      %s32 = scalar_select %p29, %s30, %s31
      %p35 = pneg %p29
      %p36 = scmp.eq.s32.totalorder %s20, 1
      %p37 = por %p35, %p36
      %p38 = scmp.ne.s32.totalorder %s30, %s33
      %p39 = scmp.eq.s32.totalorder %s20, 0
      %p40 = por %p38, %p39
      %p41 = scmp.ne.s32.totalorder %s30, %s33
      %p42 = scmp.eq.s32.totalorder %s25, 1
      %p43 = por %p41, %p42
      %p44 = scmp.ne.s32.totalorder %s33, %s34
      %p45 = scmp.eq.s32.totalorder %s25, 0
      %p46 = por %p44, %p45
      %p47 = scmp.ne.s32.totalorder %s33, %s34
      %p48 = scmp.eq.s32.totalorder %s26, 1
      %p49 = por %p47, %p48
      %p51 = scmp.ne.s32.totalorder %s34, %s50
      %p52 = scmp.eq.s32.totalorder %s26, 0
      %p53 = por %p51, %p52
      %s55 = sadd.s32 %s54, 1
      %p58 = scmp.eq.s32.totalorder %s20, 1
      %p59 = scmp.ne.s32.totalorder %s54, %s56
      %p60 = scmp.eq.s32.totalorder %s20, 0
      %p61 = por %p59, %p60
      %p62 = scmp.ne.s32.totalorder %s54, %s56
      %p63 = scmp.eq.s32.totalorder %s25, 1
      %p64 = por %p62, %p63
      %p65 = scmp.ne.s32.totalorder %s56, %s57
      %p66 = scmp.eq.s32.totalorder %s25, 0
      %p67 = por %p65, %p66
      %p68 = scmp.ne.s32.totalorder %s56, %s57
      %p69 = scmp.eq.s32.totalorder %s26, 1
      %p70 = por %p68, %p69
      %p72 = scmp.ne.s32.totalorder %s57, %s71
      %p73 = scmp.eq.s32.totalorder %s26, 0
      %p74 = por %p72, %p73
      %s76 = sadd.s32 %s75, 1
      %p79 = scmp.eq.s32.totalorder %s20, 1
      %p80 = scmp.ne.s32.totalorder %s75, %s77
      %p81 = scmp.eq.s32.totalorder %s20, 0
      %p82 = por %p80, %p81
      %p83 = scmp.ne.s32.totalorder %s75, %s77
      %p84 = scmp.eq.s32.totalorder %s25, 1
      %p85 = por %p83, %p84
      %p86 = scmp.ne.s32.totalorder %s77, %s78
      %p87 = scmp.eq.s32.totalorder %s25, 0
      %p88 = por %p86, %p87
      %p89 = scmp.ne.s32.totalorder %s77, %s78
      %p90 = scmp.eq.s32.totalorder %s26, 1
      %p91 = por %p89, %p90
      %p93 = scmp.ne.s32.totalorder %s78, %s92
      %p94 = scmp.eq.s32.totalorder %s26, 0
      %p95 = por %p93, %p94
      %s97 = sadd.s32 %s96, 1
      %p100 = scmp.eq.s32.totalorder %s20, 1
      %p101 = scmp.ne.s32.totalorder %s96, %s98
      %p102 = scmp.eq.s32.totalorder %s20, 0
      %p103 = por %p101, %p102
      %p104 = scmp.ne.s32.totalorder %s96, %s98
      %p105 = scmp.eq.s32.totalorder %s25, 1
      %p106 = por %p104, %p105
      %p107 = scmp.ne.s32.totalorder %s98, %s99
      %p108 = scmp.eq.s32.totalorder %s25, 0
      %p109 = por %p107, %p108
      %p110 = scmp.ne.s32.totalorder %s98, %s99
      %p111 = scmp.eq.s32.totalorder %s26, 1
      %p112 = por %p110, %p111
      %p114 = scmp.ne.s32.totalorder %s99, %s113
      %p115 = scmp.eq.s32.totalorder %s26, 0
      %p116 = por %p114, %p115
      %s118 = sadd.s32 %s117, 1
      %p121 = scmp.eq.s32.totalorder %s20, 1
      %p122 = scmp.ne.s32.totalorder %s117, %s119
      %p123 = scmp.eq.s32.totalorder %s20, 0
      %p124 = por %p122, %p123
      %p125 = scmp.ne.s32.totalorder %s117, %s119
      %p126 = scmp.eq.s32.totalorder %s25, 1
      %p127 = por %p125, %p126
      %p128 = scmp.ne.s32.totalorder %s119, %s120
      %p129 = scmp.eq.s32.totalorder %s25, 0
      %p130 = por %p128, %p129
      %p131 = scmp.ne.s32.totalorder %s119, %s120
      %p132 = scmp.eq.s32.totalorder %s26, 1
      %p133 = por %p131, %p132
      %p135 = scmp.ne.s32.totalorder %s120, %s134
      %p136 = scmp.eq.s32.totalorder %s26, 0
      %p137 = por %p135, %p136
      %s139 = sadd.s32 %s138, 1
      %p142 = scmp.eq.s32.totalorder %s20, 1
      %p143 = scmp.ne.s32.totalorder %s138, %s140
      %p144 = scmp.eq.s32.totalorder %s20, 0
      %p145 = por %p143, %p144
      %p146 = scmp.ne.s32.totalorder %s138, %s140
      %p147 = scmp.eq.s32.totalorder %s25, 1
      %p148 = por %p146, %p147
      %p149 = scmp.ne.s32.totalorder %s140, %s141
      %p150 = scmp.eq.s32.totalorder %s25, 0
      %p151 = por %p149, %p150
      %p152 = scmp.ne.s32.totalorder %s140, %s141
      %p153 = scmp.eq.s32.totalorder %s26, 1
      %p154 = por %p152, %p153
      %p156 = scmp.ne.s32.totalorder %s141, %s155
      %p157 = scmp.eq.s32.totalorder %s26, 0
      %p158 = por %p156, %p157
      %s159 = ssub.s32 %s20, %s27
      %p160 = scmp.eq.s32.totalorder %s159, 0
      %s162 = sadd.s32 %s161, 1
      %s163 = scalar_select %p160, %s161, %s162
      %p166 = pneg %p160
      %p167 = scmp.eq.s32.totalorder %s20, 1
      %p168 = por %p166, %p167
      %p169 = scmp.ne.s32.totalorder %s161, %s164
      %p170 = scmp.eq.s32.totalorder %s20, 0
      %p171 = por %p169, %p170
      %p172 = scmp.ne.s32.totalorder %s161, %s164
      %p173 = scmp.eq.s32.totalorder %s25, 1
      %p174 = por %p172, %p173
      %p175 = scmp.ne.s32.totalorder %s164, %s165
      %p176 = scmp.eq.s32.totalorder %s25, 0
      %p177 = por %p175, %p176
      %p178 = scmp.ne.s32.totalorder %s164, %s165
      %p179 = scmp.eq.s32.totalorder %s26, 1
      %p180 = por %p178, %p179
      %p182 = scmp.ne.s32.totalorder %s165, %s181
      %p183 = scmp.eq.s32.totalorder %s26, 0
      %p184 = por %p182, %p183
      %p185 = scmp.le.s32.totalorder 1, %s20
      %p186 = scmp.lt.s32.totalorder %s20, 3
      %p187 = pnand %p185, %p186
      %p188 = pneg %p187
      // Predicated region
      $region9: #{tpu_custom_call.1} parent=5 // pred_check
        _
      $region10: #{tpu_custom_call.1} parent=5 // pred_check_branch
        %190 = sbr.rel (%p187) target = $region12
      $region11: #{tpu_custom_call.1} parent=5 // pred_region
        %s191 = ssub.s32 %s20, 1
        // Predicated region
        $region13: #{tpu_custom_call.1} parent=11 // pred_check
          %p192 = pneg %p67
        $region14: #{tpu_custom_call.1} parent=11 // pred_check_branch
          %194 = sbr.rel (%p192) target = $region16
        $region15: #{tpu_custom_call.1} parent=11 // pred_region
          %s196 = ssub.s32 256, 256
          %197 = vsyncadd [#allocation6], %s196
          %s198 = sshll.u32 [#allocation5], 4
          %s199 = int_to_ptr.vmem [resolvable:$true] %s198
          %204 = dma.hbm_to_vmem [thread:$0]  %s1, 256, %s199, [#allocation6], 64, 64, 4
        $region16: #{tpu_custom_call.1} parent=11 // pred_fallthru
          _
        // Predicated region
        $region17: #{tpu_custom_call.1} parent=11 // pred_check
          %p205 = pneg %p88
        $region18: #{tpu_custom_call.1} parent=11 // pred_check_branch
          %207 = sbr.rel (%p205) target = $region20
        $region19: #{tpu_custom_call.1} parent=11 // pred_region
          _
        $region20: #{tpu_custom_call.1} parent=11 // pred_fallthru
          _
        // Predicated region
        $region21: #{tpu_custom_call.1} parent=11 // pred_check
          %p208 = pneg %p109
        $region22: #{tpu_custom_call.1} parent=11 // pred_check_branch
          %210 = sbr.rel (%p208) target = $region24
        $region23: #{tpu_custom_call.1} parent=11 // pred_region
          %s212 = ssub.s32 256, 256
          %213 = vsyncadd [#allocation6], %s212
          %s214 = sshll.u32 [#allocation7], 4
          %s215 = int_to_ptr.vmem [resolvable:$true] %s214
          %220 = dma.hbm_to_vmem [thread:$0]  %s3, 256, %s215, [#allocation6], 64, 64, 4
        $region24: #{tpu_custom_call.1} parent=11 // pred_fallthru
          _
        // Predicated region
        $region25: #{tpu_custom_call.1} parent=11 // pred_check
          %p221 = pneg %p130
        $region26: #{tpu_custom_call.1} parent=11 // pred_check_branch
          %223 = sbr.rel (%p221) target = $region28
        $region27: #{tpu_custom_call.1} parent=11 // pred_region
          _
        $region28: #{tpu_custom_call.1} parent=11 // pred_fallthru
          _
        // Predicated region
        $region29: #{tpu_custom_call.1} parent=11 // pred_check
          %p224 = pneg %p151
        $region30: #{tpu_custom_call.1} parent=11 // pred_check_branch
          %226 = sbr.rel (%p224) target = $region32
        $region31: #{tpu_custom_call.1} parent=11 // pred_region
          %s228 = ssub.s32 256, 256
          %229 = vsyncadd [#allocation9], %s228
          %s230 = sshll.u32 [#allocation8], 4
          %s231 = int_to_ptr.vmem [resolvable:$true] %s230
          %236 = dma.hbm_to_vmem [thread:$0]  %s5, 256, %s231, [#allocation9], 64, 64, 4
        $region32: #{tpu_custom_call.1} parent=11 // pred_fallthru
          _
      $region12: #{tpu_custom_call.1} parent=5 // pred_fallthru
        _
      %p237 = scmp.lt.s32.totalorder %s20, 2
      // Predicated region
      $region33: #{tpu_custom_call.1} parent=5 // pred_check
        %p238 = pneg %p237
      $region34: #{tpu_custom_call.1} parent=5 // pred_check_branch
        %240 = sbr.rel (%p238) target = $region36
      $region35: #{tpu_custom_call.1} parent=5 // pred_region
        // Predicated region
        $region37: #{tpu_custom_call.1} parent=35 // pred_check
          %p241 = pneg %p40
        $region38: #{tpu_custom_call.1} parent=35 // pred_check_branch
          %243 = sbr.rel (%p241) target = $region40
        $region39: #{tpu_custom_call.1} parent=35 // pred_region
          %s244 = sand.u32 %s30, 1
          %s245 = scalar_lea.sflag [#allocation3], %s244
          %s246 = sand.u32 %s30, 1
          %s247 = smul.addr %s246, 8
          %s248 = scalar_lea.vmem [#allocation2], %s247
          %s250 = ssub.s32 128, 128
          %251 = vsyncadd %s245, %s250
          %s252 = smul.addr %s20, 128
          %s253 = scalar_lea.hbm %s0, %s252
          %s255 = sshll.u32 %s248, 4
          %s256 = int_to_ptr.vmem [resolvable:$true] %s255
          %258 = dma.hbm_to_vmem [thread:$0]  %s253, 128, %s256, %s245
        $region40: #{tpu_custom_call.1} parent=35 // pred_fallthru
          _
      $region36: #{tpu_custom_call.1} parent=5 // pred_fallthru
        _
      %p259 = scmp.le.s32.totalorder 1, %s20
      %p260 = scmp.lt.s32.totalorder %s20, 3
      %p261 = pnand %p259, %p260
      %p262 = pneg %p261
      // Predicated region
      $region41: #{tpu_custom_call.1} parent=5 // pred_check
        _
      $region42: #{tpu_custom_call.1} parent=5 // pred_check_branch
        %264 = sbr.rel (%p261) target = $region44
      $region43: #{tpu_custom_call.1} parent=5 // pred_region
        %s265 = ssub.s32 %s20, 1
        %s266 = sand.u32 %s33, 1
        %s267 = scalar_lea.sflag [#allocation3], %s266
        %s268 = sand.u32 %s33, 1
        %s269 = smul.addr %s268, 8
        %s270 = scalar_lea.vmem [#allocation2], %s269
        // Predicated region
        $region45: #{tpu_custom_call.1} parent=43 // pred_check
          %p271 = pneg %p46
        $region46: #{tpu_custom_call.1} parent=43 // pred_check_branch
          %273 = sbr.rel (%p271) target = $region48
        $region47: #{tpu_custom_call.1} parent=43 // pred_region
          %274 = dma.done %s267, 128
        $region48: #{tpu_custom_call.1} parent=43 // pred_fallthru
          _
        // Predicated region
        $region49: #{tpu_custom_call.1} parent=43 // pred_check
          %p275 = pneg %p67
        $region50: #{tpu_custom_call.1} parent=43 // pred_check_branch
          %277 = sbr.rel (%p275) target = $region52
        $region51: #{tpu_custom_call.1} parent=43 // pred_region
          %278 = dma.done [#allocation6], 256
        $region52: #{tpu_custom_call.1} parent=43 // pred_fallthru
          _
        // Predicated region
        $region53: #{tpu_custom_call.1} parent=43 // pred_check
          %p279 = pneg %p109
        $region54: #{tpu_custom_call.1} parent=43 // pred_check_branch
          %281 = sbr.rel (%p279) target = $region56
        $region55: #{tpu_custom_call.1} parent=43 // pred_region
          %282 = dma.done [#allocation6], 256
        $region56: #{tpu_custom_call.1} parent=43 // pred_fallthru
          _
        // Predicated region
        $region57: #{tpu_custom_call.1} parent=43 // pred_check
          %p283 = pneg %p151
        $region58: #{tpu_custom_call.1} parent=43 // pred_check_branch
          %285 = sbr.rel (%p283) target = $region60
        $region59: #{tpu_custom_call.1} parent=43 // pred_region
          %286 = dma.done [#allocation9], 256
        $region60: #{tpu_custom_call.1} parent=43 // pred_fallthru
          _
        %s287 = sand.u32 %s33, 1
        %s288 = scalar_lea.sflag [#allocation3], %s287
        %s289 = sand.u32 %s33, 1
        %s290 = smul.addr %s289, 8
        %s291 = scalar_lea.vmem [#allocation2], %s290
        %p292 = pneg %p46
        %p293 = pneg %p43
        %p294 = pneg %p67
        %p295 = pneg %p64
        %p296 = pneg %p88
        %p297 = pneg %p85
        %p298 = pneg %p109
        %p299 = pneg %p106
        %p300 = pneg %p130
        %p301 = pneg %p127
        %p302 = pneg %p151
        %p303 = pneg %p148
        %p304 = pneg %p177
        %p305 = pneg %p174
        %s306 = sand.u32 %s164, 1
        %s307 = scalar_lea.sflag [#allocation4], %s306
        %s308 = sand.u32 %s164, 1
        %s309 = smul.addr %s308, 8
        %s310 = scalar_lea.vmem [#allocation10], %s309
        %v312 = vld [vmem:[%s270] sm:$0xff]
        %v313 = vpack.c.bf16 %v312, %v312
        %v314 = vld [vmem:[#allocation5] sm:$0xf]
        %v315 = vld [vmem:[#allocation5 + $0x4] sm:$0xf]
        %v316 = vld [vmem:[#allocation5 + $0x8] sm:$0xf]
        %v317 = vld [vmem:[#allocation5 + $0xc] sm:$0xf]
        %v318 = vld [vmem:[%s2] sm:$0x1]
        %v320 = vlaneseq
        %v321 = vshrl.u32 %v320, 7
        %v322 = vsub.s32 0, %v321
        %v323 = vrot.slane %v318, %v322
        %v329 = vunpack.c.l.b16 %v314
        %v330 = vunpack.c.l.b16 %v315
        %v331 = vunpack.c.l.b16 %v316
        %v332 = vunpack.c.l.b16 %v317
        %v333 = vpack.c.b16 %v330, %v329
        %v334 = vpack.c.b16 %v332, %v331
        %vm337 = vcmask 261120
        %v339 = vsel %vm337, %v313, 0
        %341 = vmatprep.subr.bf16.mxu0 0
        %342 = vmatpush1.bf16.msra.mxu0 0
        %343 = vmatprep.subr.bf16.mxu0 0
        %344 = vmatpush1.bf16.msra.mxu0 0
        %345 = vmatprep.subr.bf16.mxu0 0
        %346 = vmatpush1.bf16.msra.mxu0 0
        %347 = vmatprep.subr.bf16.mxu0 0
        %348 = vmatpush1.bf16.msra.mxu0 0
        %349 = vmatprep.subr.bf16.mxu0 0
        %350 = vmatpush1.bf16.msra.mxu0 0
        %351 = vmatprep.subr.bf16.mxu0 0
        %352 = vmatpush1.bf16.msra.mxu0 0
        %353 = vmatprep.subr.bf16.mxu0 0
        %354 = vmatpush1.bf16.msra.mxu0 %v334
        %355 = vmatprep.subr.bf16.mxu0 0
        %356 = vmatpush1.bf16.msra.mxu0 %v333
        %357 = vmatprep.subr.bf16.mxu0 0
        %358 = vmatpush2.bf16.msra.mxu0 0
        %359 = vmatprep.subr.bf16.mxu0 0
        %360 = vmatpush2.bf16.msra.mxu0 0
        %361 = vmatprep.subr.bf16.mxu0 0
        %362 = vmatpush2.bf16.msra.mxu0 0
        %363 = vmatprep.subr.bf16.mxu0 0
        %364 = vmatpush2.bf16.msra.mxu0 0
        %365 = vmatprep.subr.bf16.mxu0 0
        %366 = vmatpush2.bf16.msra.mxu0 0
        %367 = vmatprep.subr.bf16.mxu0 0
        %368 = vmatpush2.bf16.msra.mxu0 0
        %369 = vmatprep.subr.bf16.mxu0 0
        %370 = vmatpush2.bf16.msra.mxu0 0
        %371 = vmatprep.subr.bf16.mxu0 0
        %372 = vmatpush2.bf16.msra.mxu0 0
        %373 = vmatprep.mubr.bf16.mxu0 0
        %374 = vmatmul.mubr.bf16.gmra.mxu0 %v339
        %v375 = vpop.f32.mrf.mxu0
        %v376 = vadd.f32 %v323, %v375
        %v377 = vpop.f32.mrf.mxu0
        %v378 = vpop.f32.mrf.mxu0
        %v379 = vpop.f32.mrf.mxu0
        %380 = vdwg.mxu0
        %382 = vrot.lane.b32.xlu0 %v376, 120
        %v383 = vpop.permute.xlu0 %382
        %385 = vrot.lane.b32.xlu0 %v376, 112
        %v386 = vpop.permute.xlu0 %385
        %388 = vrot.lane.b32.xlu0 %v376, 104
        %v389 = vpop.permute.xlu0 %388
        %v391 = vcombine.low %v376, %v386
        %v392 = vcombine.high %v376, %v386
        %v394 = vunpack.c.l.s4 1983009808
        %v395 = vunpack.c.0.s8 %v394
        %v396 = vlaneseq
        %v397 = vshrl.u32 %v396, 7
        %v398 = vsub.s32 %v395, %v397
        %v399 = vrot.slane %v391, %v398
        %v401 = vunpack.c.l.s4 1983009808
        %v402 = vunpack.c.0.s8 %v401
        %v403 = vlaneseq
        %v404 = vshrl.u32 %v403, 7
        %v405 = vsub.s32 %v402, %v404
        %v406 = vrot.slane %v392, %v405
        %v407 = vcombine.low %v383, %v389
        %v408 = vcombine.high %v383, %v389
        %v410 = vunpack.c.l.s4 1983009808
        %v411 = vunpack.c.0.s8 %v410
        %v412 = vlaneseq
        %v413 = vshrl.u32 %v412, 7
        %v414 = vsub.s32 %v411, %v413
        %v415 = vrot.slane %v407, %v414
        %v417 = vunpack.c.l.s4 1983009808
        %v418 = vunpack.c.0.s8 %v417
        %v419 = vlaneseq
        %v420 = vshrl.u32 %v419, 7
        %v421 = vsub.s32 %v418, %v420
        %v422 = vrot.slane %v408, %v421
        %v423 = vcombine.low %v399, %v415
        %v424 = vcombine.high %v399, %v415
        %v426 = vunpack.c.l.s4 1934713408
        %v427 = vunpack.c.0.s8 %v426
        %v428 = vlaneseq
        %v429 = vshrl.u32 %v428, 7
        %v430 = vsub.s32 %v427, %v429
        %v431 = vrot.slane %v423, %v430
        %v433 = vunpack.c.l.s4 1934713408
        %v434 = vunpack.c.0.s8 %v433
        %v435 = vlaneseq
        %v436 = vshrl.u32 %v435, 7
        %v437 = vsub.s32 %v434, %v436
        %v438 = vrot.slane %v424, %v437
        %v439 = vcombine.low %v406, %v422
        %v440 = vcombine.high %v406, %v422
        %v442 = vunpack.c.l.s4 1934713408
        %v443 = vunpack.c.0.s8 %v442
        %v444 = vlaneseq
        %v445 = vshrl.u32 %v444, 7
        %v446 = vsub.s32 %v443, %v445
        %v447 = vrot.slane %v439, %v446
        %v449 = vunpack.c.l.s4 1934713408
        %v450 = vunpack.c.0.s8 %v449
        %v451 = vlaneseq
        %v452 = vshrl.u32 %v451, 7
        %v453 = vsub.s32 %v450, %v452
        %v454 = vrot.slane %v440, %v453
        %v455 = vcombine.high %v431, 0.0
        %v456 = vcombine.high %v438, 0.0
        %v457 = vcombine.high %v447, 0.0
        %v458 = vcombine.high %v454, 0.0
        %v459 = vcombine.low %v431, %v438
        %v461 = vunpack.c.l.s4 1983009808
        %v462 = vunpack.c.0.s8 %v461
        %v463 = vlaneseq
        %v464 = vshrl.u32 %v463, 7
        %v465 = vsub.s32 %v462, %v464
        %v466 = vrot.slane %v459, %v465
        %v467 = vcombine.low %v455, %v456
        %v469 = vunpack.c.l.s4 1983009808
        %v470 = vunpack.c.0.s8 %v469
        %v471 = vlaneseq
        %v472 = vshrl.u32 %v471, 7
        %v473 = vsub.s32 %v470, %v472
        %v474 = vrot.slane %v467, %v473
        %v475 = vcombine.low %v447, %v454
        %v477 = vunpack.c.l.s4 1983009808
        %v478 = vunpack.c.0.s8 %v477
        %v479 = vlaneseq
        %v480 = vshrl.u32 %v479, 7
        %v481 = vsub.s32 %v478, %v480
        %v482 = vrot.slane %v475, %v481
        %v483 = vcombine.low %v457, %v458
        %v485 = vunpack.c.l.s4 1983009808
        %v486 = vunpack.c.0.s8 %v485
        %v487 = vlaneseq
        %v488 = vshrl.u32 %v487, 7
        %v489 = vsub.s32 %v486, %v488
        %v490 = vrot.slane %v483, %v489
        %v491 = vcombine.low %v466, %v474
        %v492 = vcombine.high %v466, %v474
        %v494 = vunpack.c.l.s4 1934713408
        %v495 = vunpack.c.0.s8 %v494
        %v496 = vlaneseq
        %v497 = vshrl.u32 %v496, 7
        %v498 = vsub.s32 %v495, %v497
        %v499 = vrot.slane %v491, %v498
        %v501 = vunpack.c.l.s4 1934713408
        %v502 = vunpack.c.0.s8 %v501
        %v503 = vlaneseq
        %v504 = vshrl.u32 %v503, 7
        %v505 = vsub.s32 %v502, %v504
        %v506 = vrot.slane %v492, %v505
        %v507 = vcombine.low %v482, %v490
        %v508 = vcombine.high %v482, %v490
        %v510 = vunpack.c.l.s4 1934713408
        %v511 = vunpack.c.0.s8 %v510
        %v512 = vlaneseq
        %v513 = vshrl.u32 %v512, 7
        %v514 = vsub.s32 %v511, %v513
        %v515 = vrot.slane %v507, %v514
        %v517 = vunpack.c.l.s4 1934713408
        %v518 = vunpack.c.0.s8 %v517
        %v519 = vlaneseq
        %v520 = vshrl.u32 %v519, 7
        %v521 = vsub.s32 %v518, %v520
        %v522 = vrot.slane %v508, %v521
        %v523 = vcombine.low %v499, %v515
        %v524 = vcombine.high %v499, %v515
        %v525 = vcombine.low %v506, %v522
        %v526 = vcombine.high %v506, %v522
        %v527 = vpack.c.bf16 %v523, %v523
        %v528 = vpack.c.bf16 %v524, %v524
        %v529 = vpack.c.bf16 %v525, %v525
        %v530 = vpack.c.bf16 %v526, %v526
        %531 = vrot.lane.b32.xlu0 %v376, 96
        %v532 = vpop.permute.xlu0 %531
        %533 = vrot.lane.b32.xlu0 %v383, 96
        %v534 = vpop.permute.xlu0 %533
        %535 = vrot.lane.b32.xlu0 %v386, 96
        %v536 = vpop.permute.xlu0 %535
        %537 = vrot.lane.b32.xlu0 %v389, 96
        %v538 = vpop.permute.xlu0 %537
        %v543 = vcombine.low %v532, %v536
        %v544 = vcombine.high %v532, %v536
        %v546 = vunpack.c.l.s4 1983009808
        %v547 = vunpack.c.0.s8 %v546
        %v548 = vlaneseq
        %v549 = vshrl.u32 %v548, 7
        %v550 = vsub.s32 %v547, %v549
        %v551 = vrot.slane %v543, %v550
        %v553 = vunpack.c.l.s4 1983009808
        %v554 = vunpack.c.0.s8 %v553
        %v555 = vlaneseq
        %v556 = vshrl.u32 %v555, 7
        %v557 = vsub.s32 %v554, %v556
        %v558 = vrot.slane %v544, %v557
        %v559 = vcombine.low %v534, %v538
        %v560 = vcombine.high %v534, %v538
        %v562 = vunpack.c.l.s4 1983009808
        %v563 = vunpack.c.0.s8 %v562
        %v564 = vlaneseq
        %v565 = vshrl.u32 %v564, 7
        %v566 = vsub.s32 %v563, %v565
        %v567 = vrot.slane %v559, %v566
        %v569 = vunpack.c.l.s4 1983009808
        %v570 = vunpack.c.0.s8 %v569
        %v571 = vlaneseq
        %v572 = vshrl.u32 %v571, 7
        %v573 = vsub.s32 %v570, %v572
        %v574 = vrot.slane %v560, %v573
        %v575 = vcombine.low %v551, %v567
        %v576 = vcombine.high %v551, %v567
        %v578 = vunpack.c.l.s4 1934713408
        %v579 = vunpack.c.0.s8 %v578
        %v580 = vlaneseq
        %v581 = vshrl.u32 %v580, 7
        %v582 = vsub.s32 %v579, %v581
        %v583 = vrot.slane %v575, %v582
        %v585 = vunpack.c.l.s4 1934713408
        %v586 = vunpack.c.0.s8 %v585
        %v587 = vlaneseq
        %v588 = vshrl.u32 %v587, 7
        %v589 = vsub.s32 %v586, %v588
        %v590 = vrot.slane %v576, %v589
        %v591 = vcombine.low %v558, %v574
        %v592 = vcombine.high %v558, %v574
        %v594 = vunpack.c.l.s4 1934713408
        %v595 = vunpack.c.0.s8 %v594
        %v596 = vlaneseq
        %v597 = vshrl.u32 %v596, 7
        %v598 = vsub.s32 %v595, %v597
        %v599 = vrot.slane %v591, %v598
        %v601 = vunpack.c.l.s4 1934713408
        %v602 = vunpack.c.0.s8 %v601
        %v603 = vlaneseq
        %v604 = vshrl.u32 %v603, 7
        %v605 = vsub.s32 %v602, %v604
        %v606 = vrot.slane %v592, %v605
        %v607 = vcombine.high %v583, 0.0
        %v608 = vcombine.high %v590, 0.0
        %v609 = vcombine.high %v599, 0.0
        %v610 = vcombine.high %v606, 0.0
        %v611 = vcombine.low %v583, %v590
        %v613 = vunpack.c.l.s4 1983009808
        %v614 = vunpack.c.0.s8 %v613
        %v615 = vlaneseq
        %v616 = vshrl.u32 %v615, 7
        %v617 = vsub.s32 %v614, %v616
        %v618 = vrot.slane %v611, %v617
        %v619 = vcombine.low %v607, %v608
        %v621 = vunpack.c.l.s4 1983009808
        %v622 = vunpack.c.0.s8 %v621
        %v623 = vlaneseq
        %v624 = vshrl.u32 %v623, 7
        %v625 = vsub.s32 %v622, %v624
        %v626 = vrot.slane %v619, %v625
        %v627 = vcombine.low %v599, %v606
        %v629 = vunpack.c.l.s4 1983009808
        %v630 = vunpack.c.0.s8 %v629
        %v631 = vlaneseq
        %v632 = vshrl.u32 %v631, 7
        %v633 = vsub.s32 %v630, %v632
        %v634 = vrot.slane %v627, %v633
        %v635 = vcombine.low %v609, %v610
        %v637 = vunpack.c.l.s4 1983009808
        %v638 = vunpack.c.0.s8 %v637
        %v639 = vlaneseq
        %v640 = vshrl.u32 %v639, 7
        %v641 = vsub.s32 %v638, %v640
        %v642 = vrot.slane %v635, %v641
        %v643 = vcombine.low %v618, %v626
        %v644 = vcombine.high %v618, %v626
        %v646 = vunpack.c.l.s4 1934713408
        %v647 = vunpack.c.0.s8 %v646
        %v648 = vlaneseq
        %v649 = vshrl.u32 %v648, 7
        %v650 = vsub.s32 %v647, %v649
        %v651 = vrot.slane %v643, %v650
        %v653 = vunpack.c.l.s4 1934713408
        %v654 = vunpack.c.0.s8 %v653
        %v655 = vlaneseq
        %v656 = vshrl.u32 %v655, 7
        %v657 = vsub.s32 %v654, %v656
        %v658 = vrot.slane %v644, %v657
        %v659 = vcombine.low %v634, %v642
        %v660 = vcombine.high %v634, %v642
        %v662 = vunpack.c.l.s4 1934713408
        %v663 = vunpack.c.0.s8 %v662
        %v664 = vlaneseq
        %v665 = vshrl.u32 %v664, 7
        %v666 = vsub.s32 %v663, %v665
        %v667 = vrot.slane %v659, %v666
        %v669 = vunpack.c.l.s4 1934713408
        %v670 = vunpack.c.0.s8 %v669
        %v671 = vlaneseq
        %v672 = vshrl.u32 %v671, 7
        %v673 = vsub.s32 %v670, %v672
        %v674 = vrot.slane %v660, %v673
        %v675 = vcombine.low %v651, %v667
        %v676 = vcombine.high %v651, %v667
        %v677 = vcombine.low %v658, %v674
        %v678 = vcombine.high %v658, %v674
        %v679 = vpack.c.bf16 %v675, %v675
        %v680 = vpack.c.bf16 %v676, %v676
        %v681 = vpack.c.bf16 %v677, %v677
        %v682 = vpack.c.bf16 %v678, %v678
        %683 = vrot.lane.b32.xlu0 %v376, 64
        %v684 = vpop.permute.xlu0 %683
        %685 = vrot.lane.b32.xlu0 %v383, 64
        %v686 = vpop.permute.xlu0 %685
        %687 = vrot.lane.b32.xlu0 %v386, 64
        %v688 = vpop.permute.xlu0 %687
        %689 = vrot.lane.b32.xlu0 %v389, 64
        %v690 = vpop.permute.xlu0 %689
        %v695 = vcombine.low %v684, %v688
        %v696 = vcombine.high %v684, %v688
        %v698 = vunpack.c.l.s4 1983009808
        %v699 = vunpack.c.0.s8 %v698
        %v700 = vlaneseq
        %v701 = vshrl.u32 %v700, 7
        %v702 = vsub.s32 %v699, %v701
        %v703 = vrot.slane %v695, %v702
        %v705 = vunpack.c.l.s4 1983009808
        %v706 = vunpack.c.0.s8 %v705
        %v707 = vlaneseq
        %v708 = vshrl.u32 %v707, 7
        %v709 = vsub.s32 %v706, %v708
        %v710 = vrot.slane %v696, %v709
        %v711 = vcombine.low %v686, %v690
        %v712 = vcombine.high %v686, %v690
        %v714 = vunpack.c.l.s4 1983009808
        %v715 = vunpack.c.0.s8 %v714
        %v716 = vlaneseq
        %v717 = vshrl.u32 %v716, 7
        %v718 = vsub.s32 %v715, %v717
        %v719 = vrot.slane %v711, %v718
        %v721 = vunpack.c.l.s4 1983009808
        %v722 = vunpack.c.0.s8 %v721
        %v723 = vlaneseq
        %v724 = vshrl.u32 %v723, 7
        %v725 = vsub.s32 %v722, %v724
        %v726 = vrot.slane %v712, %v725
        %v727 = vcombine.low %v703, %v719
        %v728 = vcombine.high %v703, %v719
        %v730 = vunpack.c.l.s4 1934713408
        %v731 = vunpack.c.0.s8 %v730
        %v732 = vlaneseq
        %v733 = vshrl.u32 %v732, 7
        %v734 = vsub.s32 %v731, %v733
        %v735 = vrot.slane %v727, %v734
        %v737 = vunpack.c.l.s4 1934713408
        %v738 = vunpack.c.0.s8 %v737
        %v739 = vlaneseq
        %v740 = vshrl.u32 %v739, 7
        %v741 = vsub.s32 %v738, %v740
        %v742 = vrot.slane %v728, %v741
        %v743 = vcombine.low %v710, %v726
        %v744 = vcombine.high %v710, %v726
        %v746 = vunpack.c.l.s4 1934713408
        %v747 = vunpack.c.0.s8 %v746
        %v748 = vlaneseq
        %v749 = vshrl.u32 %v748, 7
        %v750 = vsub.s32 %v747, %v749
        %v751 = vrot.slane %v743, %v750
        %v753 = vunpack.c.l.s4 1934713408
        %v754 = vunpack.c.0.s8 %v753
        %v755 = vlaneseq
        %v756 = vshrl.u32 %v755, 7
        %v757 = vsub.s32 %v754, %v756
        %v758 = vrot.slane %v744, %v757
        %v759 = vcombine.high %v735, 0.0
        %v760 = vcombine.high %v742, 0.0
        %v761 = vcombine.high %v751, 0.0
        %v762 = vcombine.high %v758, 0.0
        %v763 = vcombine.low %v735, %v742
        %v765 = vunpack.c.l.s4 1983009808
        %v766 = vunpack.c.0.s8 %v765
        %v767 = vlaneseq
        %v768 = vshrl.u32 %v767, 7
        %v769 = vsub.s32 %v766, %v768
        %v770 = vrot.slane %v763, %v769
        %v771 = vcombine.low %v759, %v760
        %v773 = vunpack.c.l.s4 1983009808
        %v774 = vunpack.c.0.s8 %v773
        %v775 = vlaneseq
        %v776 = vshrl.u32 %v775, 7
        %v777 = vsub.s32 %v774, %v776
        %v778 = vrot.slane %v771, %v777
        %v779 = vcombine.low %v751, %v758
        %v781 = vunpack.c.l.s4 1983009808
        %v782 = vunpack.c.0.s8 %v781
        %v783 = vlaneseq
        %v784 = vshrl.u32 %v783, 7
        %v785 = vsub.s32 %v782, %v784
        %v786 = vrot.slane %v779, %v785
        %v787 = vcombine.low %v761, %v762
        %v789 = vunpack.c.l.s4 1983009808
        %v790 = vunpack.c.0.s8 %v789
        %v791 = vlaneseq
        %v792 = vshrl.u32 %v791, 7
        %v793 = vsub.s32 %v790, %v792
        %v794 = vrot.slane %v787, %v793
        %v795 = vcombine.low %v770, %v778
        %v796 = vcombine.high %v770, %v778
        %v798 = vunpack.c.l.s4 1934713408
        %v799 = vunpack.c.0.s8 %v798
        %v800 = vlaneseq
        %v801 = vshrl.u32 %v800, 7
        %v802 = vsub.s32 %v799, %v801
        %v803 = vrot.slane %v795, %v802
        %v805 = vunpack.c.l.s4 1934713408
        %v806 = vunpack.c.0.s8 %v805
        %v807 = vlaneseq
        %v808 = vshrl.u32 %v807, 7
        %v809 = vsub.s32 %v806, %v808
        %v810 = vrot.slane %v796, %v809
        %v811 = vcombine.low %v786, %v794
        %v812 = vcombine.high %v786, %v794
        %v814 = vunpack.c.l.s4 1934713408
        %v815 = vunpack.c.0.s8 %v814
        %v816 = vlaneseq
        %v817 = vshrl.u32 %v816, 7
        %v818 = vsub.s32 %v815, %v817
        %v819 = vrot.slane %v811, %v818
        %v821 = vunpack.c.l.s4 1934713408
        %v822 = vunpack.c.0.s8 %v821
        %v823 = vlaneseq
        %v824 = vshrl.u32 %v823, 7
        %v825 = vsub.s32 %v822, %v824
        %v826 = vrot.slane %v812, %v825
        %v827 = vcombine.low %v803, %v819
        %v828 = vcombine.high %v803, %v819
        %v829 = vcombine.low %v810, %v826
        %v830 = vcombine.high %v810, %v826
        %v831 = vpack.c.bf16 %v827, %v827
        %v832 = vpack.c.bf16 %v828, %v828
        %v833 = vpack.c.bf16 %v829, %v829
        %v834 = vpack.c.bf16 %v830, %v830
        %vm835 = vcmask 64512
        %v837 = vsel %vm835, %v527, 0
        %v840 = vsel %vm835, %v679, 0
        %842 = vmatprep.subr.bf16.mxu0 0
        %843 = vmatpush1.bf16.xpose.msra.mxu0 0
        %844 = vmatprep.subr.bf16.mxu0 0
        %845 = vmatpush1.bf16.xpose.msra.mxu0 0
        %846 = vmatprep.subr.bf16.mxu0 0
        %847 = vmatpush1.bf16.xpose.msra.mxu0 0
        %848 = vmatprep.subr.bf16.mxu0 0
        %849 = vmatpush1.bf16.xpose.msra.mxu0 0
        %850 = vmatprep.subr.bf16.mxu0 0
        %851 = vmatpush1.bf16.xpose.msra.mxu0 0
        %852 = vmatprep.subr.bf16.mxu0 0
        %853 = vmatpush1.bf16.xpose.msra.mxu0 0
        %854 = vmatprep.subr.bf16.mxu0 0
        %855 = vmatpush1.bf16.xpose.msra.mxu0 0
        %856 = vmatprep.subr.bf16.mxu0 0
        %857 = vmatpush1.bf16.xpose.msra.mxu0 %v840
        %858 = vmatprep.subr.bf16.mxu0 0
        %859 = vmatpush2.bf16.xpose.msra.mxu0 0
        %860 = vmatprep.subr.bf16.mxu0 0
        %861 = vmatpush2.bf16.xpose.msra.mxu0 0
        %862 = vmatprep.subr.bf16.mxu0 0
        %863 = vmatpush2.bf16.xpose.msra.mxu0 0
        %864 = vmatprep.subr.bf16.mxu0 0
        %865 = vmatpush2.bf16.xpose.msra.mxu0 0
        %866 = vmatprep.subr.bf16.mxu0 0
        %867 = vmatpush2.bf16.xpose.msra.mxu0 0
        %868 = vmatprep.subr.bf16.mxu0 0
        %869 = vmatpush2.bf16.xpose.msra.mxu0 0
        %870 = vmatprep.subr.bf16.mxu0 0
        %871 = vmatpush2.bf16.xpose.msra.mxu0 0
        %872 = vmatprep.subr.bf16.mxu0 0
        %873 = vmatpush2.bf16.xpose.msra.mxu0 0
        %874 = vmatprep.mubr.bf16.mxu0 0
        %875 = vmatmul.mubr.bf16.gmra.mxu0 %v837
        %v876 = vpop.f32.mrf.mxu0
        %v877 = vadd.f32 0.0, %v876
        %v878 = vpop.f32.mrf.mxu0
        %v879 = vpop.f32.mrf.mxu0
        %v880 = vpop.f32.mrf.mxu0
        %881 = vdwg.mxu0
        %v883 = vsel %vm835, %v528, 0
        %v886 = vsel %vm835, %v680, 0
        %888 = vmatprep.subr.bf16.mxu0 0
        %889 = vmatpush1.bf16.xpose.msra.mxu0 0
        %890 = vmatprep.subr.bf16.mxu0 0
        %891 = vmatpush1.bf16.xpose.msra.mxu0 0
        %892 = vmatprep.subr.bf16.mxu0 0
        %893 = vmatpush1.bf16.xpose.msra.mxu0 0
        %894 = vmatprep.subr.bf16.mxu0 0
        %895 = vmatpush1.bf16.xpose.msra.mxu0 0
        %896 = vmatprep.subr.bf16.mxu0 0
        %897 = vmatpush1.bf16.xpose.msra.mxu0 0
        %898 = vmatprep.subr.bf16.mxu0 0
        %899 = vmatpush1.bf16.xpose.msra.mxu0 0
        %900 = vmatprep.subr.bf16.mxu0 0
        %901 = vmatpush1.bf16.xpose.msra.mxu0 0
        %902 = vmatprep.subr.bf16.mxu0 0
        %903 = vmatpush1.bf16.xpose.msra.mxu0 %v886
        %904 = vmatprep.subr.bf16.mxu0 0
        %905 = vmatpush2.bf16.xpose.msra.mxu0 0
        %906 = vmatprep.subr.bf16.mxu0 0
        %907 = vmatpush2.bf16.xpose.msra.mxu0 0
        %908 = vmatprep.subr.bf16.mxu0 0
        %909 = vmatpush2.bf16.xpose.msra.mxu0 0
        %910 = vmatprep.subr.bf16.mxu0 0
        %911 = vmatpush2.bf16.xpose.msra.mxu0 0
        %912 = vmatprep.subr.bf16.mxu0 0
        %913 = vmatpush2.bf16.xpose.msra.mxu0 0
        %914 = vmatprep.subr.bf16.mxu0 0
        %915 = vmatpush2.bf16.xpose.msra.mxu0 0
        %916 = vmatprep.subr.bf16.mxu0 0
        %917 = vmatpush2.bf16.xpose.msra.mxu0 0
        %918 = vmatprep.subr.bf16.mxu0 0
        %919 = vmatpush2.bf16.xpose.msra.mxu0 0
        %920 = vmatprep.mubr.bf16.mxu0 0
        %921 = vmatmul.mubr.bf16.gmra.mxu0 %v883
        %v922 = vpop.f32.mrf.mxu0
        %v923 = vadd.f32 0.0, %v922
        %v924 = vpop.f32.mrf.mxu0
        %v925 = vpop.f32.mrf.mxu0
        %v926 = vpop.f32.mrf.mxu0
        %927 = vdwg.mxu0
        %v929 = vsel %vm835, %v529, 0
        %v932 = vsel %vm835, %v681, 0
        %934 = vmatprep.subr.bf16.mxu0 0
        %935 = vmatpush1.bf16.xpose.msra.mxu0 0
        %936 = vmatprep.subr.bf16.mxu0 0
        %937 = vmatpush1.bf16.xpose.msra.mxu0 0
        %938 = vmatprep.subr.bf16.mxu0 0
        %939 = vmatpush1.bf16.xpose.msra.mxu0 0
        %940 = vmatprep.subr.bf16.mxu0 0
        %941 = vmatpush1.bf16.xpose.msra.mxu0 0
        %942 = vmatprep.subr.bf16.mxu0 0
        %943 = vmatpush1.bf16.xpose.msra.mxu0 0
        %944 = vmatprep.subr.bf16.mxu0 0
        %945 = vmatpush1.bf16.xpose.msra.mxu0 0
        %946 = vmatprep.subr.bf16.mxu0 0
        %947 = vmatpush1.bf16.xpose.msra.mxu0 0
        %948 = vmatprep.subr.bf16.mxu0 0
        %949 = vmatpush1.bf16.xpose.msra.mxu0 %v932
        %950 = vmatprep.subr.bf16.mxu0 0
        %951 = vmatpush2.bf16.xpose.msra.mxu0 0
        %952 = vmatprep.subr.bf16.mxu0 0
        %953 = vmatpush2.bf16.xpose.msra.mxu0 0
        %954 = vmatprep.subr.bf16.mxu0 0
        %955 = vmatpush2.bf16.xpose.msra.mxu0 0
        %956 = vmatprep.subr.bf16.mxu0 0
        %957 = vmatpush2.bf16.xpose.msra.mxu0 0
        %958 = vmatprep.subr.bf16.mxu0 0
        %959 = vmatpush2.bf16.xpose.msra.mxu0 0
        %960 = vmatprep.subr.bf16.mxu0 0
        %961 = vmatpush2.bf16.xpose.msra.mxu0 0
        %962 = vmatprep.subr.bf16.mxu0 0
        %963 = vmatpush2.bf16.xpose.msra.mxu0 0
        %964 = vmatprep.subr.bf16.mxu0 0
        %965 = vmatpush2.bf16.xpose.msra.mxu0 0
        %966 = vmatprep.mubr.bf16.mxu0 0
        %967 = vmatmul.mubr.bf16.gmra.mxu0 %v929
        %v968 = vpop.f32.mrf.mxu0
        %v969 = vadd.f32 0.0, %v968
        %v970 = vpop.f32.mrf.mxu0
        %v971 = vpop.f32.mrf.mxu0
        %v972 = vpop.f32.mrf.mxu0
        %973 = vdwg.mxu0
        %v975 = vsel %vm835, %v530, 0
        %v978 = vsel %vm835, %v682, 0
        %980 = vmatprep.subr.bf16.mxu0 0
        %981 = vmatpush1.bf16.xpose.msra.mxu0 0
        %982 = vmatprep.subr.bf16.mxu0 0
        %983 = vmatpush1.bf16.xpose.msra.mxu0 0
        %984 = vmatprep.subr.bf16.mxu0 0
        %985 = vmatpush1.bf16.xpose.msra.mxu0 0
        %986 = vmatprep.subr.bf16.mxu0 0
        %987 = vmatpush1.bf16.xpose.msra.mxu0 0
        %988 = vmatprep.subr.bf16.mxu0 0
        %989 = vmatpush1.bf16.xpose.msra.mxu0 0
        %990 = vmatprep.subr.bf16.mxu0 0
        %991 = vmatpush1.bf16.xpose.msra.mxu0 0
        %992 = vmatprep.subr.bf16.mxu0 0
        %993 = vmatpush1.bf16.xpose.msra.mxu0 0
        %994 = vmatprep.subr.bf16.mxu0 0
        %995 = vmatpush1.bf16.xpose.msra.mxu0 %v978
        %996 = vmatprep.subr.bf16.mxu0 0
        %997 = vmatpush2.bf16.xpose.msra.mxu0 0
        %998 = vmatprep.subr.bf16.mxu0 0
        %999 = vmatpush2.bf16.xpose.msra.mxu0 0
        %1000 = vmatprep.subr.bf16.mxu0 0
        %1001 = vmatpush2.bf16.xpose.msra.mxu0 0
        %1002 = vmatprep.subr.bf16.mxu0 0
        %1003 = vmatpush2.bf16.xpose.msra.mxu0 0
        %1004 = vmatprep.subr.bf16.mxu0 0
        %1005 = vmatpush2.bf16.xpose.msra.mxu0 0
        %1006 = vmatprep.subr.bf16.mxu0 0
        %1007 = vmatpush2.bf16.xpose.msra.mxu0 0
        %1008 = vmatprep.subr.bf16.mxu0 0
        %1009 = vmatpush2.bf16.xpose.msra.mxu0 0
        %1010 = vmatprep.subr.bf16.mxu0 0
        %1011 = vmatpush2.bf16.xpose.msra.mxu0 0
        %1012 = vmatprep.mubr.bf16.mxu0 0
        %1013 = vmatmul.mubr.bf16.gmra.mxu0 %v975
        %v1014 = vpop.f32.mrf.mxu0
        %v1015 = vadd.f32 0.0, %v1014
        %v1016 = vpop.f32.mrf.mxu0
        %v1017 = vpop.f32.mrf.mxu0
        %v1018 = vpop.f32.mrf.mxu0
        %1019 = vdwg.mxu0
        %v1020 = vsel %vm835, %v877, -inf
        %1021 = vmax.xlane.f32.xlu0 %v1020
        %v1022 = vpop.xlane.xlu0 %1021
        %v1023 = vsel %vm835, %v923, -inf
        %1024 = vmax.xlane.f32.xlu0 %v1023
        %v1025 = vpop.xlane.xlu0 %1024
        %v1026 = vsel %vm835, %v969, -inf
        %1027 = vmax.xlane.f32.xlu0 %v1026
        %v1028 = vpop.xlane.xlu0 %1027
        %v1029 = vsel %vm835, %v1015, -inf
        %1030 = vmax.xlane.f32.xlu0 %v1029
        %v1031 = vpop.xlane.xlu0 %1030
        %v1032 = vsub.f32 %v877, %v1022
        %v1033 = vsub.f32 %v923, %v1025
        %v1034 = vsub.f32 %v969, %v1028
        %v1035 = vsub.f32 %v1015, %v1031
        %v1036 = vmul.f32 %v1032, 1.442695
        %v1037 = vpow.pop %v1036
        %v1038 = vmul.f32 %v1033, 1.442695
        %v1039 = vpow.pop %v1038
        %v1040 = vmul.f32 %v1034, 1.442695
        %v1041 = vpow.pop %v1040
        %v1042 = vmul.f32 %v1035, 1.442695
        %v1043 = vpow.pop %v1042
        %v1044 = vsel %vm835, %v1037, 0.0
        %1045 = vadd.xlane.f32.xlu0 %v1044
        %v1046 = vpop.xlane.xlu0 %1045
        %v1047 = vsel %vm835, %v1039, 0.0
        %1048 = vadd.xlane.f32.xlu0 %v1047
        %v1049 = vpop.xlane.xlu0 %1048
        %v1050 = vsel %vm835, %v1041, 0.0
        %1051 = vadd.xlane.f32.xlu0 %v1050
        %v1052 = vpop.xlane.xlu0 %1051
        %v1053 = vsel %vm835, %v1043, 0.0
        %1054 = vadd.xlane.f32.xlu0 %v1053
        %v1055 = vpop.xlane.xlu0 %1054
        %v1056 = vrcp.pop %v1046
        %v1057 = vrcp.pop %v1049
        %v1058 = vrcp.pop %v1052
        %v1059 = vrcp.pop %v1055
        %v1060 = vmul.f32 %v1037, %v1056
        %v1061 = vmul.f32 %v1039, %v1057
        %v1062 = vmul.f32 %v1041, %v1058
        %v1063 = vmul.f32 %v1043, %v1059
        %v1064 = vpack.c.bf16 %v1060, %v1060
        %v1065 = vpack.c.bf16 %v1061, %v1061
        %v1066 = vpack.c.bf16 %v1062, %v1062
        %v1067 = vpack.c.bf16 %v1063, %v1063
        %v1069 = vsel %vm835, %v1064, 0
        %vm1071 = vcmask 1043456
        %v1073 = vsel %vm1071, %v831, 0
        %1075 = vmatprep.subr.bf16.mxu0 0
        %1076 = vmatpush1.bf16.msra.mxu0 0
        %1077 = vmatprep.subr.bf16.mxu0 0
        %1078 = vmatpush1.bf16.msra.mxu0 0
        %1079 = vmatprep.subr.bf16.mxu0 0
        %1080 = vmatpush1.bf16.msra.mxu0 0
        %1081 = vmatprep.subr.bf16.mxu0 0
        %1082 = vmatpush1.bf16.msra.mxu0 0
        %1083 = vmatprep.subr.bf16.mxu0 0
        %1084 = vmatpush1.bf16.msra.mxu0 0
        %1085 = vmatprep.subr.bf16.mxu0 0
        %1086 = vmatpush1.bf16.msra.mxu0 0
        %1087 = vmatprep.subr.bf16.mxu0 0
        %1088 = vmatpush1.bf16.msra.mxu0 0
        %1089 = vmatprep.subr.bf16.mxu0 0
        %1090 = vmatpush1.bf16.msra.mxu0 %v1073
        %1091 = vmatprep.subr.bf16.mxu0 0
        %1092 = vmatpush2.bf16.msra.mxu0 0
        %1093 = vmatprep.subr.bf16.mxu0 0
        %1094 = vmatpush2.bf16.msra.mxu0 0
        %1095 = vmatprep.subr.bf16.mxu0 0
        %1096 = vmatpush2.bf16.msra.mxu0 0
        %1097 = vmatprep.subr.bf16.mxu0 0
        %1098 = vmatpush2.bf16.msra.mxu0 0
        %1099 = vmatprep.subr.bf16.mxu0 0
        %1100 = vmatpush2.bf16.msra.mxu0 0
        %1101 = vmatprep.subr.bf16.mxu0 0
        %1102 = vmatpush2.bf16.msra.mxu0 0
        %1103 = vmatprep.subr.bf16.mxu0 0
        %1104 = vmatpush2.bf16.msra.mxu0 0
        %1105 = vmatprep.subr.bf16.mxu0 0
        %1106 = vmatpush2.bf16.msra.mxu0 0
        %1107 = vmatprep.mubr.bf16.mxu0 0
        %1108 = vmatmul.mubr.bf16.gmra.mxu0 %v1069
        %v1109 = vpop.f32.mrf.mxu0
        %v1110 = vadd.f32 0.0, %v1109
        %v1111 = vpop.f32.mrf.mxu0
        %v1112 = vpop.f32.mrf.mxu0
        %v1113 = vpop.f32.mrf.mxu0
        %1114 = vdwg.mxu0
        %v1116 = vsel %vm835, %v1065, 0
        %v1119 = vsel %vm1071, %v832, 0
        %1121 = vmatprep.subr.bf16.mxu0 0
        %1122 = vmatpush1.bf16.msra.mxu0 0
        %1123 = vmatprep.subr.bf16.mxu0 0
        %1124 = vmatpush1.bf16.msra.mxu0 0
        %1125 = vmatprep.subr.bf16.mxu0 0
        %1126 = vmatpush1.bf16.msra.mxu0 0
        %1127 = vmatprep.subr.bf16.mxu0 0
        %1128 = vmatpush1.bf16.msra.mxu0 0
        %1129 = vmatprep.subr.bf16.mxu0 0
        %1130 = vmatpush1.bf16.msra.mxu0 0
        %1131 = vmatprep.subr.bf16.mxu0 0
        %1132 = vmatpush1.bf16.msra.mxu0 0
        %1133 = vmatprep.subr.bf16.mxu0 0
        %1134 = vmatpush1.bf16.msra.mxu0 0
        %1135 = vmatprep.subr.bf16.mxu0 0
        %1136 = vmatpush1.bf16.msra.mxu0 %v1119
        %1137 = vmatprep.subr.bf16.mxu0 0
        %1138 = vmatpush2.bf16.msra.mxu0 0
        %1139 = vmatprep.subr.bf16.mxu0 0
        %1140 = vmatpush2.bf16.msra.mxu0 0
        %1141 = vmatprep.subr.bf16.mxu0 0
        %1142 = vmatpush2.bf16.msra.mxu0 0
        %1143 = vmatprep.subr.bf16.mxu0 0
        %1144 = vmatpush2.bf16.msra.mxu0 0
        %1145 = vmatprep.subr.bf16.mxu0 0
        %1146 = vmatpush2.bf16.msra.mxu0 0
        %1147 = vmatprep.subr.bf16.mxu0 0
        %1148 = vmatpush2.bf16.msra.mxu0 0
        %1149 = vmatprep.subr.bf16.mxu0 0
        %1150 = vmatpush2.bf16.msra.mxu0 0
        %1151 = vmatprep.subr.bf16.mxu0 0
        %1152 = vmatpush2.bf16.msra.mxu0 0
        %1153 = vmatprep.mubr.bf16.mxu0 0
        %1154 = vmatmul.mubr.bf16.gmra.mxu0 %v1116
        %v1155 = vpop.f32.mrf.mxu0
        %v1156 = vadd.f32 0.0, %v1155
        %v1157 = vpop.f32.mrf.mxu0
        %v1158 = vpop.f32.mrf.mxu0
        %v1159 = vpop.f32.mrf.mxu0
        %1160 = vdwg.mxu0
        %v1162 = vsel %vm835, %v1066, 0
        %v1165 = vsel %vm1071, %v833, 0
        %1167 = vmatprep.subr.bf16.mxu0 0
        %1168 = vmatpush1.bf16.msra.mxu0 0
        %1169 = vmatprep.subr.bf16.mxu0 0
        %1170 = vmatpush1.bf16.msra.mxu0 0
        %1171 = vmatprep.subr.bf16.mxu0 0
        %1172 = vmatpush1.bf16.msra.mxu0 0
        %1173 = vmatprep.subr.bf16.mxu0 0
        %1174 = vmatpush1.bf16.msra.mxu0 0
        %1175 = vmatprep.subr.bf16.mxu0 0
        %1176 = vmatpush1.bf16.msra.mxu0 0
        %1177 = vmatprep.subr.bf16.mxu0 0
        %1178 = vmatpush1.bf16.msra.mxu0 0
        %1179 = vmatprep.subr.bf16.mxu0 0
        %1180 = vmatpush1.bf16.msra.mxu0 0
        %1181 = vmatprep.subr.bf16.mxu0 0
        %1182 = vmatpush1.bf16.msra.mxu0 %v1165
        %1183 = vmatprep.subr.bf16.mxu0 0
        %1184 = vmatpush2.bf16.msra.mxu0 0
        %1185 = vmatprep.subr.bf16.mxu0 0
        %1186 = vmatpush2.bf16.msra.mxu0 0
        %1187 = vmatprep.subr.bf16.mxu0 0
        %1188 = vmatpush2.bf16.msra.mxu0 0
        %1189 = vmatprep.subr.bf16.mxu0 0
        %1190 = vmatpush2.bf16.msra.mxu0 0
        %1191 = vmatprep.subr.bf16.mxu0 0
        %1192 = vmatpush2.bf16.msra.mxu0 0
        %1193 = vmatprep.subr.bf16.mxu0 0
        %1194 = vmatpush2.bf16.msra.mxu0 0
        %1195 = vmatprep.subr.bf16.mxu0 0
        %1196 = vmatpush2.bf16.msra.mxu0 0
        %1197 = vmatprep.subr.bf16.mxu0 0
        %1198 = vmatpush2.bf16.msra.mxu0 0
        %1199 = vmatprep.mubr.bf16.mxu0 0
        %1200 = vmatmul.mubr.bf16.gmra.mxu0 %v1162
        %v1201 = vpop.f32.mrf.mxu0
        %v1202 = vadd.f32 0.0, %v1201
        %v1203 = vpop.f32.mrf.mxu0
        %v1204 = vpop.f32.mrf.mxu0
        %v1205 = vpop.f32.mrf.mxu0
        %1206 = vdwg.mxu0
        %v1208 = vsel %vm835, %v1067, 0
        %v1211 = vsel %vm1071, %v834, 0
        %1213 = vmatprep.subr.bf16.mxu0 0
        %1214 = vmatpush1.bf16.msra.mxu0 0
        %1215 = vmatprep.subr.bf16.mxu0 0
        %1216 = vmatpush1.bf16.msra.mxu0 0
        %1217 = vmatprep.subr.bf16.mxu0 0
        %1218 = vmatpush1.bf16.msra.mxu0 0
        %1219 = vmatprep.subr.bf16.mxu0 0
        %1220 = vmatpush1.bf16.msra.mxu0 0
        %1221 = vmatprep.subr.bf16.mxu0 0
        %1222 = vmatpush1.bf16.msra.mxu0 0
        %1223 = vmatprep.subr.bf16.mxu0 0
        %1224 = vmatpush1.bf16.msra.mxu0 0
        %1225 = vmatprep.subr.bf16.mxu0 0
        %1226 = vmatpush1.bf16.msra.mxu0 0
        %1227 = vmatprep.subr.bf16.mxu0 0
        %1228 = vmatpush1.bf16.msra.mxu0 %v1211
        %1229 = vmatprep.subr.bf16.mxu0 0
        %1230 = vmatpush2.bf16.msra.mxu0 0
        %1231 = vmatprep.subr.bf16.mxu0 0
        %1232 = vmatpush2.bf16.msra.mxu0 0
        %1233 = vmatprep.subr.bf16.mxu0 0
        %1234 = vmatpush2.bf16.msra.mxu0 0
        %1235 = vmatprep.subr.bf16.mxu0 0
        %1236 = vmatpush2.bf16.msra.mxu0 0
        %1237 = vmatprep.subr.bf16.mxu0 0
        %1238 = vmatpush2.bf16.msra.mxu0 0
        %1239 = vmatprep.subr.bf16.mxu0 0
        %1240 = vmatpush2.bf16.msra.mxu0 0
        %1241 = vmatprep.subr.bf16.mxu0 0
        %1242 = vmatpush2.bf16.msra.mxu0 0
        %1243 = vmatprep.subr.bf16.mxu0 0
        %1244 = vmatpush2.bf16.msra.mxu0 0
        %1245 = vmatprep.mubr.bf16.mxu0 0
        %1246 = vmatmul.mubr.bf16.gmra.mxu0 %v1208
        %v1247 = vpop.f32.mrf.mxu0
        %v1248 = vadd.f32 0.0, %v1247
        %v1249 = vpop.f32.mrf.mxu0
        %v1250 = vpop.f32.mrf.mxu0
        %v1251 = vpop.f32.mrf.mxu0
        %1252 = vdwg.mxu0
        %v1253 = vcombine.low %v1110, %v1202
        %v1254 = vcombine.high %v1110, %v1202
        %v1256 = vunpack.c.l.s4 1983009808
        %v1257 = vunpack.c.0.s8 %v1256
        %v1258 = vlaneseq
        %v1259 = vshrl.u32 %v1258, 7
        %v1260 = vsub.s32 %v1257, %v1259
        %v1261 = vrot.slane %v1253, %v1260
        %v1263 = vunpack.c.l.s4 1983009808
        %v1264 = vunpack.c.0.s8 %v1263
        %v1265 = vlaneseq
        %v1266 = vshrl.u32 %v1265, 7
        %v1267 = vsub.s32 %v1264, %v1266
        %v1268 = vrot.slane %v1254, %v1267
        %v1269 = vcombine.low %v1156, %v1248
        %v1270 = vcombine.high %v1156, %v1248
        %v1272 = vunpack.c.l.s4 1983009808
        %v1273 = vunpack.c.0.s8 %v1272
        %v1274 = vlaneseq
        %v1275 = vshrl.u32 %v1274, 7
        %v1276 = vsub.s32 %v1273, %v1275
        %v1277 = vrot.slane %v1269, %v1276
        %v1279 = vunpack.c.l.s4 1983009808
        %v1280 = vunpack.c.0.s8 %v1279
        %v1281 = vlaneseq
        %v1282 = vshrl.u32 %v1281, 7
        %v1283 = vsub.s32 %v1280, %v1282
        %v1284 = vrot.slane %v1270, %v1283
        %v1285 = vcombine.low %v1261, %v1277
        %v1286 = vcombine.high %v1261, %v1277
        %v1288 = vunpack.c.l.s4 1934713408
        %v1289 = vunpack.c.0.s8 %v1288
        %v1290 = vlaneseq
        %v1291 = vshrl.u32 %v1290, 7
        %v1292 = vsub.s32 %v1289, %v1291
        %v1293 = vrot.slane %v1285, %v1292
        %v1295 = vunpack.c.l.s4 1934713408
        %v1296 = vunpack.c.0.s8 %v1295
        %v1297 = vlaneseq
        %v1298 = vshrl.u32 %v1297, 7
        %v1299 = vsub.s32 %v1296, %v1298
        %v1300 = vrot.slane %v1286, %v1299
        %v1301 = vcombine.low %v1268, %v1284
        %v1302 = vcombine.high %v1268, %v1284
        %v1304 = vunpack.c.l.s4 1934713408
        %v1305 = vunpack.c.0.s8 %v1304
        %v1306 = vlaneseq
        %v1307 = vshrl.u32 %v1306, 7
        %v1308 = vsub.s32 %v1305, %v1307
        %v1309 = vrot.slane %v1301, %v1308
        %v1311 = vunpack.c.l.s4 1934713408
        %v1312 = vunpack.c.0.s8 %v1311
        %v1313 = vlaneseq
        %v1314 = vshrl.u32 %v1313, 7
        %v1315 = vsub.s32 %v1312, %v1314
        %v1316 = vrot.slane %v1302, %v1315
        %v1317 = vcombine.high %v1293, 0.0
        %v1318 = vcombine.high %v1300, 0.0
        %v1319 = vcombine.high %v1309, 0.0
        %v1320 = vcombine.high %v1316, 0.0
        %v1321 = vcombine.low %v1293, %v1300
        %v1323 = vunpack.c.l.s4 1983009808
        %v1324 = vunpack.c.0.s8 %v1323
        %v1325 = vlaneseq
        %v1326 = vshrl.u32 %v1325, 7
        %v1327 = vsub.s32 %v1324, %v1326
        %v1328 = vrot.slane %v1321, %v1327
        %v1329 = vcombine.low %v1317, %v1318
        %v1331 = vunpack.c.l.s4 1983009808
        %v1332 = vunpack.c.0.s8 %v1331
        %v1333 = vlaneseq
        %v1334 = vshrl.u32 %v1333, 7
        %v1335 = vsub.s32 %v1332, %v1334
        %v1336 = vrot.slane %v1329, %v1335
        %v1337 = vcombine.low %v1309, %v1316
        %v1339 = vunpack.c.l.s4 1983009808
        %v1340 = vunpack.c.0.s8 %v1339
        %v1341 = vlaneseq
        %v1342 = vshrl.u32 %v1341, 7
        %v1343 = vsub.s32 %v1340, %v1342
        %v1344 = vrot.slane %v1337, %v1343
        %v1345 = vcombine.low %v1319, %v1320
        %v1347 = vunpack.c.l.s4 1983009808
        %v1348 = vunpack.c.0.s8 %v1347
        %v1349 = vlaneseq
        %v1350 = vshrl.u32 %v1349, 7
        %v1351 = vsub.s32 %v1348, %v1350
        %v1352 = vrot.slane %v1345, %v1351
        %v1353 = vcombine.low %v1328, %v1336
        %v1354 = vcombine.high %v1328, %v1336
        %v1356 = vunpack.c.l.s4 1934713408
        %v1357 = vunpack.c.0.s8 %v1356
        %v1358 = vlaneseq
        %v1359 = vshrl.u32 %v1358, 7
        %v1360 = vsub.s32 %v1357, %v1359
        %v1361 = vrot.slane %v1353, %v1360
        %v1363 = vunpack.c.l.s4 1934713408
        %v1364 = vunpack.c.0.s8 %v1363
        %v1365 = vlaneseq
        %v1366 = vshrl.u32 %v1365, 7
        %v1367 = vsub.s32 %v1364, %v1366
        %v1368 = vrot.slane %v1354, %v1367
        %v1369 = vcombine.low %v1344, %v1352
        %v1370 = vcombine.high %v1344, %v1352
        %v1372 = vunpack.c.l.s4 1934713408
        %v1373 = vunpack.c.0.s8 %v1372
        %v1374 = vlaneseq
        %v1375 = vshrl.u32 %v1374, 7
        %v1376 = vsub.s32 %v1373, %v1375
        %v1377 = vrot.slane %v1369, %v1376
        %v1379 = vunpack.c.l.s4 1934713408
        %v1380 = vunpack.c.0.s8 %v1379
        %v1381 = vlaneseq
        %v1382 = vshrl.u32 %v1381, 7
        %v1383 = vsub.s32 %v1380, %v1382
        %v1384 = vrot.slane %v1370, %v1383
        %v1385 = vcombine.low %v1361, %v1377
        %v1386 = vcombine.high %v1361, %v1377
        %v1387 = vcombine.low %v1368, %v1384
        %v1388 = vcombine.high %v1368, %v1384
        %1390 = vrot.lane.b32.xlu0 %v1386, 8
        %v1391 = vpop.permute.xlu0 %1390
        %1394 = vrot.lane.b32.xlu0 %v1387, 16
        %v1395 = vpop.permute.xlu0 %1394
        %1398 = vrot.lane.b32.xlu0 %v1388, 24
        %v1399 = vpop.permute.xlu0 %1398
        %v1401 = vsel %vm835, %v1385, %v1391
        %vm1402 = vcmask 130048
        %v1403 = vsel %vm1402, %v1401, %v1395
        %vm1404 = vcmask 195584
        %v1405 = vsel %vm1404, %v1403, %v1399
        %v1406 = vpack.c.bf16 %v1405, %v1405
        %v1407 = vld [vmem:[#allocation7] sm:$0xf]
        %v1408 = vld [vmem:[#allocation7 + $0x4] sm:$0xf]
        %v1409 = vld [vmem:[#allocation7 + $0x8] sm:$0xf]
        %v1410 = vld [vmem:[#allocation7 + $0xc] sm:$0xf]
        %v1411 = vld [vmem:[%s4] sm:$0x1]
        %v1413 = vlaneseq
        %v1414 = vshrl.u32 %v1413, 7
        %v1415 = vsub.s32 0, %v1414
        %v1416 = vrot.slane %v1411, %v1415
        %v1422 = vunpack.c.l.b16 %v1407
        %v1423 = vunpack.c.l.b16 %v1408
        %v1424 = vunpack.c.l.b16 %v1409
        %v1425 = vunpack.c.l.b16 %v1410
        %v1426 = vpack.c.b16 %v1423, %v1422
        %v1427 = vpack.c.b16 %v1425, %v1424
        %v1431 = vsel %vm337, %v1406, 0
        %1433 = vmatprep.subr.bf16.mxu0 0
        %1434 = vmatpush1.bf16.msra.mxu0 0
        %1435 = vmatprep.subr.bf16.mxu0 0
        %1436 = vmatpush1.bf16.msra.mxu0 0
        %1437 = vmatprep.subr.bf16.mxu0 0
        %1438 = vmatpush1.bf16.msra.mxu0 0
        %1439 = vmatprep.subr.bf16.mxu0 0
        %1440 = vmatpush1.bf16.msra.mxu0 0
        %1441 = vmatprep.subr.bf16.mxu0 0
        %1442 = vmatpush1.bf16.msra.mxu0 0
        %1443 = vmatprep.subr.bf16.mxu0 0
        %1444 = vmatpush1.bf16.msra.mxu0 0
        %1445 = vmatprep.subr.bf16.mxu0 0
        %1446 = vmatpush1.bf16.msra.mxu0 %v1427
        %1447 = vmatprep.subr.bf16.mxu0 0
        %1448 = vmatpush1.bf16.msra.mxu0 %v1426
        %1449 = vmatprep.subr.bf16.mxu0 0
        %1450 = vmatpush2.bf16.msra.mxu0 0
        %1451 = vmatprep.subr.bf16.mxu0 0
        %1452 = vmatpush2.bf16.msra.mxu0 0
        %1453 = vmatprep.subr.bf16.mxu0 0
        %1454 = vmatpush2.bf16.msra.mxu0 0
        %1455 = vmatprep.subr.bf16.mxu0 0
        %1456 = vmatpush2.bf16.msra.mxu0 0
        %1457 = vmatprep.subr.bf16.mxu0 0
        %1458 = vmatpush2.bf16.msra.mxu0 0
        %1459 = vmatprep.subr.bf16.mxu0 0
        %1460 = vmatpush2.bf16.msra.mxu0 0
        %1461 = vmatprep.subr.bf16.mxu0 0
        %1462 = vmatpush2.bf16.msra.mxu0 0
        %1463 = vmatprep.subr.bf16.mxu0 0
        %1464 = vmatpush2.bf16.msra.mxu0 0
        %1465 = vmatprep.mubr.bf16.mxu0 0
        %1466 = vmatmul.mubr.bf16.gmra.mxu0 %v1431
        %v1467 = vpop.f32.mrf.mxu0
        %v1468 = vadd.f32 %v1416, %v1467
        %v1469 = vpop.f32.mrf.mxu0
        %v1470 = vpop.f32.mrf.mxu0
        %v1471 = vpop.f32.mrf.mxu0
        %1472 = vdwg.mxu0
        %v1473 = vadd.f32 %v1468, %v312
        %v1474 = vpack.c.bf16 %v1473, %v1473
        %v1475 = vld [vmem:[#allocation8] sm:$0xf]
        %v1476 = vld [vmem:[#allocation8 + $0x4] sm:$0xf]
        %v1477 = vld [vmem:[#allocation8 + $0x8] sm:$0xf]
        %v1478 = vld [vmem:[#allocation8 + $0xc] sm:$0xf]
        %v1483 = vunpack.c.l.b16 %v1475
        %v1484 = vunpack.c.l.b16 %v1476
        %v1485 = vunpack.c.l.b16 %v1477
        %v1486 = vunpack.c.l.b16 %v1478
        %v1487 = vpack.c.b16 %v1484, %v1483
        %v1488 = vpack.c.b16 %v1486, %v1485
        %v1492 = vsel %vm337, %v1474, 0
        %1494 = vmatprep.subr.bf16.mxu0 0
        %1495 = vmatpush1.bf16.msra.mxu0 0
        %1496 = vmatprep.subr.bf16.mxu0 0
        %1497 = vmatpush1.bf16.msra.mxu0 0
        %1498 = vmatprep.subr.bf16.mxu0 0
        %1499 = vmatpush1.bf16.msra.mxu0 0
        %1500 = vmatprep.subr.bf16.mxu0 0
        %1501 = vmatpush1.bf16.msra.mxu0 0
        %1502 = vmatprep.subr.bf16.mxu0 0
        %1503 = vmatpush1.bf16.msra.mxu0 0
        %1504 = vmatprep.subr.bf16.mxu0 0
        %1505 = vmatpush1.bf16.msra.mxu0 0
        %1506 = vmatprep.subr.bf16.mxu0 0
        %1507 = vmatpush1.bf16.msra.mxu0 %v1488
        %1508 = vmatprep.subr.bf16.mxu0 0
        %1509 = vmatpush1.bf16.msra.mxu0 %v1487
        %1510 = vmatprep.subr.bf16.mxu0 0
        %1511 = vmatpush2.bf16.msra.mxu0 0
        %1512 = vmatprep.subr.bf16.mxu0 0
        %1513 = vmatpush2.bf16.msra.mxu0 0
        %1514 = vmatprep.subr.bf16.mxu0 0
        %1515 = vmatpush2.bf16.msra.mxu0 0
        %1516 = vmatprep.subr.bf16.mxu0 0
        %1517 = vmatpush2.bf16.msra.mxu0 0
        %1518 = vmatprep.subr.bf16.mxu0 0
        %1519 = vmatpush2.bf16.msra.mxu0 0
        %1520 = vmatprep.subr.bf16.mxu0 0
        %1521 = vmatpush2.bf16.msra.mxu0 0
        %1522 = vmatprep.subr.bf16.mxu0 0
        %1523 = vmatpush2.bf16.msra.mxu0 0
        %1524 = vmatprep.subr.bf16.mxu0 0
        %1525 = vmatpush2.bf16.msra.mxu0 0
        %1526 = vmatprep.mubr.bf16.mxu0 0
        %1527 = vmatmul.mubr.bf16.gmra.mxu0 %v1492
        %v1528 = vpop.f32.mrf.mxu0
        %v1529 = vadd.f32 %v1473, %v1528
        %v1530 = vpop.f32.mrf.mxu0
        %v1531 = vpop.f32.mrf.mxu0
        %v1532 = vpop.f32.mrf.mxu0
        %1533 = vdwg.mxu0
        %1534 = vst.msk [vmem:[%s310] sm:$0xff] %vm337, %v1529
        %s1535 = sand.u32 %s164, 1
        %s1536 = scalar_lea.sflag [#allocation4], %s1535
        %s1537 = sand.u32 %s164, 1
        %s1538 = smul.addr %s1537, 8
        %s1539 = scalar_lea.vmem [#allocation10], %s1538
        // Predicated region
        $region61: #{tpu_custom_call.1} parent=43 // pred_check
          %p1540 = pneg %p174
        $region62: #{tpu_custom_call.1} parent=43 // pred_check_branch
          %1542 = sbr.rel (%p1540) target = $region64
        $region63: #{tpu_custom_call.1} parent=43 // pred_region
          %s1544 = ssub.s32 128, 128
          %1545 = vsyncadd %s1536, %s1544
          %s1546 = smul.addr %s25, 128
          %s1547 = scalar_lea.hbm %s6, %s1546
          %s1549 = sshll.u32 %s1539, 4
          %s1550 = int_to_ptr.vmem [resolvable:$true] %s1549
          %1552 = dma.vmem_to_hbm [thread:$0]  %s1550, 128, %s1547, %s1536
        $region64: #{tpu_custom_call.1} parent=43 // pred_fallthru
          _
      $region44: #{tpu_custom_call.1} parent=5 // pred_fallthru
        _
      %p1553 = scmp.le.s32.totalorder 2, %s20
      // Predicated region
      $region65: #{tpu_custom_call.1} parent=5 // pred_check
        %p1554 = pneg %p1553
      $region66: #{tpu_custom_call.1} parent=5 // pred_check_branch
        %1556 = sbr.rel (%p1554) target = $region68
      $region67: #{tpu_custom_call.1} parent=5 // pred_region
        %s1557 = ssub.s32 %s20, 2
        // Predicated region
        $region69: #{tpu_custom_call.1} parent=67 // pred_check
          %p1558 = pneg %p180
        $region70: #{tpu_custom_call.1} parent=67 // pred_check_branch
          %1560 = sbr.rel (%p1558) target = $region72
        $region71: #{tpu_custom_call.1} parent=67 // pred_region
          %s1561 = sand.u32 %s165, 1
          %s1562 = scalar_lea.sflag [#allocation4], %s1561
          %s1563 = sand.u32 %s165, 1
          %s1564 = smul.addr %s1563, 8
          %s1565 = scalar_lea.vmem [#allocation10], %s1564
          %1566 = dma.done %s1562, 128
        $region72: #{tpu_custom_call.1} parent=67 // pred_fallthru
          _
      $region68: #{tpu_custom_call.1} parent=5 // pred_fallthru
        _
    $region6: #{tpu_custom_call.1} parent=1 // loop_footer
      %s24 = sadd.s32 1, %s20
    $region7: #{tpu_custom_call.1} parent=1 // loop_footer_branch
      %19 = sbr.rel target = $region3
    $region8: #{tpu_custom_call.1} parent=1 // loop_exit
      _
    %1567 = vsyncpa [#allocation3], 1
    %s1568 = scalar_lea.sflag [#allocation3], 1
    %1569 = vsyncpa %s1568, 1
    %1570 = vsyncpa [#allocation6], 1
    %1571 = vsyncpa [#allocation9], 1
    %1572 = vsyncpa [#allocation4], 1
    %s1573 = scalar_lea.sflag [#allocation4], 1
    %1574 = vsyncpa %s1573, 1

</llo_original>
